<compile_context>
chip_gen: v7x
topology: tpu7x:2x2x1
jax: 0.10.0
libtpu: 0.0.40
codegen_flags: <defaults>
</compile_context>

<pallas_src>
import numpy as np
import jax
import jax.numpy as jnp
from jax.experimental import pallas as pl
from jax.experimental.pallas import tpu as pltpu

EPS = 1e-5
MXU_DTYPE = jnp.bfloat16   # matmul-operand dtype (bf16-native MXU on v6e/v7x)


def _band_weights(w_hwio, w_dim):
    """Fold the conv's W-direction taps (and W zero-padding) into band matrices.

    Returns (KH, W*Cin, W*Cout): block kh maps an (H-shifted) input slab with
    lanes (w'*Cin + ci) to output lanes (w*Cout + co), selecting tap
    kw = w' - w + 1 and exact zero outside the 3-wide band.
    """
    kh_dim, kw_dim, cin, cout = w_hwio.shape
    wi = jnp.arange(w_dim)
    kw_idx = wi[:, None] - wi[None, :] + (kw_dim // 2)          # (W', W)
    valid = (kw_idx >= 0) & (kw_idx < kw_dim)
    band = w_hwio[:, jnp.clip(kw_idx, 0, kw_dim - 1), :, :]     # (KH, W', W, Cin, Cout)
    band = band * valid[None, :, :, None, None].astype(w_hwio.dtype)
    band = jnp.transpose(band, (0, 1, 3, 2, 4))                 # (KH, W', Cin, W, Cout)
    return band.reshape(kh_dim, w_dim * cin, w_dim * cout).astype(MXU_DTYPE)


def _make_kernel(n_dim, h_dim, w_dim, c_dim, eps):
    nh = n_dim * h_dim
    wc = w_dim * c_dim
    inv_m = 1.0 / float(n_dim * h_dim * w_dim)   # BN sample count per channel

    def kernel(x_ref, w1_ref, gb1_ref, w2_ref, gb2_ref, out_ref):
        # Boundary masks for the H-direction rolls, built once and shared by
        # both conv stages.  Rows with h==0 / h==H-1 (per image) are zeroed,
        # which also kills batch-crossing rows and the slab wrap-around of the
        # cyclic roll (image edges coincide with batch edges in the slab).
        h_idx = jax.lax.broadcasted_iota(jnp.int32, (nh, wc), 0) % h_dim
        not_top = h_idx != 0
        not_bot = h_idx != (h_dim - 1)

        # Channel-replication matrix for BN stats (lane i, j share a channel
        # iff i % C == j % C); generated in-kernel -> no HBM->VMEM DMA.
        li = jax.lax.broadcasted_iota(jnp.int32, (wc, wc), 0) % c_dim
        lj = jax.lax.broadcasted_iota(jnp.int32, (wc, wc), 1) % c_dim
        repl = (li == lj).astype(jnp.float32)

        def conv_bn(xf, w_ref, gb_ref):
            # H taps: sublane rolls (XLU) + boundary mask (VPU); no MXU work.
            up = jnp.where(not_top, pltpu.roll(xf, shift=1, axis=0), 0.0)
            dn = jnp.where(not_bot, pltpu.roll(xf, shift=nh - 1, axis=0), 0.0)
            # Three accumulating 128-deep matmuls (no 3x-wide patch copy);
            # operands cast to bf16 at the MXU boundary, f32 accumulation.
            acc = jnp.dot(up.astype(MXU_DTYPE), w_ref[0],
                          preferred_element_type=jnp.float32)
            acc = acc + jnp.dot(xf.astype(MXU_DTYPE), w_ref[1],
                                preferred_element_type=jnp.float32)
            acc = acc + jnp.dot(dn.astype(MXU_DTYPE), w_ref[2],
                                preferred_element_type=jnp.float32)
            # Training-mode BN: reduce rows first (f32), then one tiny
            # (2, WC) x (WC, WC) replication matmul aggregates + broadcasts the
            # per-channel sums across the W lane-blocks.
            rowsum = jnp.sum(acc, axis=0, keepdims=True)
            rowsq = jnp.sum(acc * acc, axis=0, keepdims=True)
            stats = jnp.dot(jnp.concatenate([rowsum, rowsq], axis=0), repl,
                            preferred_element_type=jnp.float32)
            mean = stats[0:1, :] * inv_m
            var = stats[1:2, :] * inv_m - mean * mean           # biased batch variance
            scale = gb_ref[0:1, :] * jax.lax.rsqrt(var + eps)   # EUP rsqrt
            offset = gb_ref[1:2, :] - mean * scale
            return acc * scale + offset                         # folded BN affine

        h1 = jnp.maximum(conv_bn(x_ref[...], w1_ref, gb1_ref), 0.0)
        y = conv_bn(h1, w2_ref, gb2_ref)
        # Residual read straight from x_ref (short live range), then ReLU.
        out_ref[...] = jnp.maximum(y + x_ref[...], 0.0)

    return kernel


@jax.jit
def residual_block_forward(x_nchw, params):
    """Forward pass of ResidualBlock. x_nchw: (N, C, H, W) float32."""
    w1, g1, b1, w2, g2, b2 = params
    n_dim, c_dim, h_dim, w_dim = x_nchw.shape
    cout = w1.shape[3]
    assert cout == c_dim and w2.shape[3] == cout   # downsample=None => Cin == Cout
    wc = w_dim * cout

    # Lane-dense slab: (N, C, H, W) -> (N*H, W*C).  Channels packed with W in
    # the fast lane axis so loads/stores use all 128 lanes.
    x_slab = (jnp.transpose(x_nchw, (0, 2, 3, 1)).astype(jnp.float32)
              .reshape(n_dim * h_dim, wc))

    w1_band = _band_weights(w1, w_dim)                          # (3, W*C, W*C) bf16
    w2_band = _band_weights(w2, w_dim)
    gb1 = jnp.stack([jnp.tile(g1.astype(jnp.float32), w_dim),
                     jnp.tile(b1.astype(jnp.float32), w_dim)], axis=0)   # (2, W*C)
    gb2 = jnp.stack([jnp.tile(g2.astype(jnp.float32), w_dim),
                     jnp.tile(b2.astype(jnp.float32), w_dim)], axis=0)

    vspec = pl.BlockSpec(memory_space=pltpu.MemorySpace.VMEM)
    out_slab = pl.pallas_call(
        _make_kernel(n_dim, h_dim, w_dim, c_dim, EPS),
        out_shape=jax.ShapeDtypeStruct((n_dim * h_dim, wc), jnp.float32),
        in_specs=[vspec] * 5,
        out_specs=vspec,
    )(x_slab, w1_band, gb1, w2_band, gb2)

    out = out_slab.reshape(n_dim, h_dim, w_dim, cout)
    return jnp.transpose(out, (0, 3, 1, 2))                     # back to NCHW


def reference_forward(x_nchw, params, conv_dtype=jnp.float32):
    """Pure-JAX reference matching the PyTorch forward (training-mode BN).

    conv_dtype=jnp.bfloat16 emulates the kernel's bf16 MXU operands (f32
    accumulation) for a tight numerical comparison.
    """
    w1, g1, b1, w2, g2, b2 = params

    def conv(a, w):
        return jax.lax.conv_general_dilated(
            a.astype(conv_dtype), w.astype(conv_dtype),
            window_strides=(1, 1), padding=((1, 1), (1, 1)),
            dimension_numbers=('NCHW', 'HWIO', 'NCHW'),
            preferred_element_type=jnp.float32)

    def bn(a, g, b):
        mean = jnp.mean(a, axis=(0, 2, 3), keepdims=True)
        var = jnp.mean((a - mean) ** 2, axis=(0, 2, 3), keepdims=True)
        return ((a - mean) * jax.lax.rsqrt(var + EPS)
                * g.reshape(1, -1, 1, 1) + b.reshape(1, -1, 1, 1))

    h = jax.nn.relu(bn(conv(x_nchw, w1), g1, b1))
    h = bn(conv(h, w2), g2, b2) + x_nchw
    return jax.nn.relu(h)


if __name__ == "__main__":
    key = jax.random.PRNGKey(0)
    kx, k1, k2, k3, k4, k5, k6 = jax.random.split(key, 7)

    N, C, H, W = 2, 8, 16, 16
    Cout = C  # in_channels == out_channels so the residual add is valid.

    x = jax.random.normal(kx, (N, C, H, W), jnp.float32)
    # PyTorch conv weight is (Cout, Cin, 3, 3); stored here directly in HWIO.
    w1 = 0.1 * jax.random.normal(k1, (3, 3, C, Cout), jnp.float32)
    w2 = 0.1 * jax.random.normal(k2, (3, 3, Cout, Cout), jnp.float32)
    g1 = 1.0 + 0.1 * jax.random.normal(k3, (Cout,), jnp.float32)
    b1 = 0.1 * jax.random.normal(k4, (Cout,), jnp.float32)
    g2 = 1.0 + 0.1 * jax.random.normal(k5, (Cout,), jnp.float32)
    b2 = 0.1 * jax.random.normal(k6, (Cout,), jnp.float32)
    params = (w1, g1, b1, w2, g2, b2)

    out = residual_block_forward(x, params)
    jax.block_until_ready(out)
    assert out.shape == (N, C, H, W), out.shape

    # Tight check against a reference that uses the same bf16 MXU operands
    # (validates the roll+mask conv, band weights, and BN-stat reorder).
    ref_mixed = reference_forward(x, params, conv_dtype=MXU_DTYPE)
    np.testing.assert_allclose(np.asarray(out), np.asarray(ref_mixed),
                               rtol=5e-3, atol=5e-3)

    # Looser check against the pure-f32 PyTorch-equivalent reference; the gap
    # is the expected bf16 MXU-operand rounding (set MXU_DTYPE=float32 for
    # <1e-3 agreement).
    ref_f32 = reference_forward(x, params)
    np.testing.assert_allclose(np.asarray(out), np.asarray(ref_f32),
                               rtol=3e-2, atol=3e-2)
    print("KERNEL_OK")
</pallas_src>

<mosaic_0001>
module attributes {stable_mosaic.version = 11 : i64} {
  func.func @kernel(%arg0: memref<32x128xf32, #tpu.memory_space<vmem>>, %arg1: memref<3x128x128xbf16, #tpu.memory_space<vmem>>, %arg2: memref<2x128xf32, #tpu.memory_space<vmem>>, %arg3: memref<3x128x128xbf16, #tpu.memory_space<vmem>>, %arg4: memref<2x128xf32, #tpu.memory_space<vmem>>, %arg5: memref<32x128xf32, #tpu.memory_space<vmem>>) attributes {dimension_semantics = [], scalar_prefetch = 0 : i64, scratch_operands = 0 : i64, tpu.core_type = #tpu.core_type<tc>} {
    %0 = tpu.iota {dimensions = array<i32: 0>} : vector<32x128xi32>
    %c16_i32 = arith.constant 16 : i32
    %c0_i32 = arith.constant 0 : i32
    %1 = arith.cmpi eq, %c16_i32, %c0_i32 : i32
    %c1_i32 = arith.constant 1 : i32
    %2 = arith.select %1, %c1_i32, %c16_i32 : i32
    %3 = vector.broadcast %2 : i32 to vector<32x128xi32>
    %4 = arith.remsi %0, %3 : vector<32x128xi32>
    %c0_i32_0 = arith.constant 0 : i32
    %5 = vector.broadcast %c0_i32_0 : i32 to vector<32x128xi32>
    %6 = arith.cmpi ne, %4, %5 : vector<32x128xi32>
    %c0_i32_1 = arith.constant 0 : i32
    %7 = vector.broadcast %c0_i32_1 : i32 to vector<32x128xi32>
    %8 = arith.cmpi slt, %4, %7 : vector<32x128xi32>
    %c0_i32_2 = arith.constant 0 : i32
    %9 = arith.cmpi slt, %2, %c0_i32_2 : i32
    %10 = vector.broadcast %9 : i1 to vector<32x128xi1>
    %11 = vector.broadcast %10 : vector<32x128xi1> to vector<32x128xi1>
    %12 = arith.xori %8, %11 : vector<32x128xi1>
    %13 = arith.andi %12, %6 : vector<32x128xi1>
    %14 = vector.broadcast %2 : i32 to vector<32x128xi32>
    %15 = arith.addi %4, %14 : vector<32x128xi32>
    %16 = arith.select %13, %15, %4 : vector<32x128xi1>, vector<32x128xi32>
    %c0_i32_3 = arith.constant 0 : i32
    %17 = vector.broadcast %c0_i32_3 : i32 to vector<32x128xi32>
    %18 = arith.cmpi ne, %16, %17 : vector<32x128xi32>
    %c15_i32 = arith.constant 15 : i32
    %19 = vector.broadcast %c15_i32 : i32 to vector<32x128xi32>
    %20 = arith.cmpi ne, %16, %19 : vector<32x128xi32>
    %21 = tpu.iota {dimensions = array<i32: 0>} : vector<128x128xi32>
    %c8_i32 = arith.constant 8 : i32
    %c0_i32_4 = arith.constant 0 : i32
    %22 = arith.cmpi eq, %c8_i32, %c0_i32_4 : i32
    %c1_i32_5 = arith.constant 1 : i32
    %23 = arith.select %22, %c1_i32_5, %c8_i32 : i32
    %24 = vector.broadcast %23 : i32 to vector<128x128xi32>
    %25 = arith.remsi %21, %24 : vector<128x128xi32>
    %c0_i32_6 = arith.constant 0 : i32
    %26 = vector.broadcast %c0_i32_6 : i32 to vector<128x128xi32>
    %27 = arith.cmpi ne, %25, %26 : vector<128x128xi32>
    %c0_i32_7 = arith.constant 0 : i32
    %28 = vector.broadcast %c0_i32_7 : i32 to vector<128x128xi32>
    %29 = arith.cmpi slt, %25, %28 : vector<128x128xi32>
    %c0_i32_8 = arith.constant 0 : i32
    %30 = arith.cmpi slt, %23, %c0_i32_8 : i32
    %31 = vector.broadcast %30 : i1 to vector<128x128xi1>
    %32 = vector.broadcast %31 : vector<128x128xi1> to vector<128x128xi1>
    %33 = arith.xori %29, %32 : vector<128x128xi1>
    %34 = arith.andi %33, %27 : vector<128x128xi1>
    %35 = vector.broadcast %23 : i32 to vector<128x128xi32>
    %36 = arith.addi %25, %35 : vector<128x128xi32>
    %37 = arith.select %34, %36, %25 : vector<128x128xi1>, vector<128x128xi32>
    %38 = tpu.iota {dimensions = array<i32: 1>} : vector<128x128xi32>
    %c8_i32_9 = arith.constant 8 : i32
    %c0_i32_10 = arith.constant 0 : i32
    %39 = arith.cmpi eq, %c8_i32_9, %c0_i32_10 : i32
    %c1_i32_11 = arith.constant 1 : i32
    %40 = arith.select %39, %c1_i32_11, %c8_i32_9 : i32
    %41 = vector.broadcast %40 : i32 to vector<128x128xi32>
    %42 = arith.remsi %38, %41 : vector<128x128xi32>
    %c0_i32_12 = arith.constant 0 : i32
    %43 = vector.broadcast %c0_i32_12 : i32 to vector<128x128xi32>
    %44 = arith.cmpi ne, %42, %43 : vector<128x128xi32>
    %c0_i32_13 = arith.constant 0 : i32
    %45 = vector.broadcast %c0_i32_13 : i32 to vector<128x128xi32>
    %46 = arith.cmpi slt, %42, %45 : vector<128x128xi32>
    %c0_i32_14 = arith.constant 0 : i32
    %47 = arith.cmpi slt, %40, %c0_i32_14 : i32
    %48 = vector.broadcast %47 : i1 to vector<128x128xi1>
    %49 = vector.broadcast %48 : vector<128x128xi1> to vector<128x128xi1>
    %50 = arith.xori %46, %49 : vector<128x128xi1>
    %51 = arith.andi %50, %44 : vector<128x128xi1>
    %52 = vector.broadcast %40 : i32 to vector<128x128xi32>
    %53 = arith.addi %42, %52 : vector<128x128xi32>
    %54 = arith.select %51, %53, %42 : vector<128x128xi1>, vector<128x128xi32>
    %55 = arith.cmpi eq, %37, %54 : vector<128x128xi32>
    %56 = arith.extui %55 : vector<128x128xi1> to vector<128x128xi32>
    %57 = arith.sitofp %56 : vector<128x128xi32> to vector<128x128xf32>
    %c0 = arith.constant 0 : index
    %c0_15 = arith.constant 0 : index
    %58 = vector.load %arg0[%c0, %c0_15] : memref<32x128xf32, #tpu.memory_space<vmem>>, vector<32x128xf32>
    %c1_i32_16 = arith.constant 1 : i32
    %59 = tpu.dynamic_rotate %58 by %c1_i32_16 dim 0 : vector<32x128xf32>, i32 -> vector<32x128xf32>
    %cst = arith.constant 0.000000e+00 : f32
    %60 = vector.broadcast %cst : f32 to vector<32x128xf32>
    %61 = arith.select %18, %59, %60 : vector<32x128xi1>, vector<32x128xf32>
    %c31_i32 = arith.constant 31 : i32
    %62 = tpu.dynamic_rotate %58 by %c31_i32 dim 0 : vector<32x128xf32>, i32 -> vector<32x128xf32>
    %cst_17 = arith.constant 0.000000e+00 : f32
    %63 = vector.broadcast %cst_17 : f32 to vector<32x128xf32>
    %64 = arith.select %20, %62, %63 : vector<32x128xi1>, vector<32x128xf32>
    %65 = arith.truncf %61 : vector<32x128xf32> to vector<32x128xbf16>
    %c0_18 = arith.constant 0 : index
    %c0_19 = arith.constant 0 : index
    %c0_20 = arith.constant 0 : index
    %66 = vector.load %arg1[%c0_18, %c0_19, %c0_20] : memref<3x128x128xbf16, #tpu.memory_space<vmem>>, vector<1x128x128xbf16>
    %67 = vector.shape_cast %66 : vector<1x128x128xbf16> to vector<128x128xbf16>
    %cst_21 = arith.constant dense<0.000000e+00> : vector<32x128xf32>
    %68 = tpu.matmul %65, %67, %cst_21 {dimension_numbers = #tpu.dot_dimension_numbers<[1], [0], [0], [1], [0, 0, 1, 1], [], []>} : vector<32x128xbf16>, vector<128x128xbf16>, vector<32x128xf32> -> vector<32x128xf32>
    %69 = arith.truncf %58 : vector<32x128xf32> to vector<32x128xbf16>
    %c1 = arith.constant 1 : index
    %c0_22 = arith.constant 0 : index
    %c0_23 = arith.constant 0 : index
    %70 = vector.load %arg1[%c1, %c0_22, %c0_23] : memref<3x128x128xbf16, #tpu.memory_space<vmem>>, vector<1x128x128xbf16>
    %71 = vector.shape_cast %70 : vector<1x128x128xbf16> to vector<128x128xbf16>
    %cst_24 = arith.constant dense<0.000000e+00> : vector<32x128xf32>
    %72 = tpu.matmul %69, %71, %cst_24 {dimension_numbers = #tpu.dot_dimension_numbers<[1], [0], [0], [1], [0, 0, 1, 1], [], []>} : vector<32x128xbf16>, vector<128x128xbf16>, vector<32x128xf32> -> vector<32x128xf32>
    %73 = arith.addf %68, %72 : vector<32x128xf32>
    %74 = arith.truncf %64 : vector<32x128xf32> to vector<32x128xbf16>
    %c2 = arith.constant 2 : index
    %c0_25 = arith.constant 0 : index
    %c0_26 = arith.constant 0 : index
    %75 = vector.load %arg1[%c2, %c0_25, %c0_26] : memref<3x128x128xbf16, #tpu.memory_space<vmem>>, vector<1x128x128xbf16>
    %76 = vector.shape_cast %75 : vector<1x128x128xbf16> to vector<128x128xbf16>
    %cst_27 = arith.constant dense<0.000000e+00> : vector<32x128xf32>
    %77 = tpu.matmul %74, %76, %cst_27 {dimension_numbers = #tpu.dot_dimension_numbers<[1], [0], [0], [1], [0, 0, 1, 1], [], []>} : vector<32x128xbf16>, vector<128x128xbf16>, vector<32x128xf32> -> vector<32x128xf32>
    %78 = arith.addf %73, %77 : vector<32x128xf32>
    %cst_28 = arith.constant dense<0.000000e+00> : vector<128xf32>
    %79 = vector.multi_reduction <add>, %78, %cst_28 [0] : vector<32x128xf32> to vector<128xf32>
    %80 = vector.shape_cast %79 : vector<128xf32> to vector<1x128xf32>
    %81 = arith.mulf %78, %78 : vector<32x128xf32>
    %cst_29 = arith.constant dense<0.000000e+00> : vector<128xf32>
    %82 = vector.multi_reduction <add>, %81, %cst_29 [0] : vector<32x128xf32> to vector<128xf32>
    %83 = vector.shape_cast %82 : vector<128xf32> to vector<1x128xf32>
    %84 = tpu.concatenate %80, %83 in 0 : vector<1x128xf32>, vector<1x128xf32> -> vector<2x128xf32>
    %cst_30 = arith.constant dense<0.000000e+00> : vector<2x128xf32>
    %85 = tpu.matmul %84, %57, %cst_30 {dimension_numbers = #tpu.dot_dimension_numbers<[1], [0], [0], [1], [0, 0, 1, 1], [], []>} : vector<2x128xf32>, vector<128x128xf32>, vector<2x128xf32> -> vector<2x128xf32>
    %86 = vector.extract_strided_slice %85 {offsets = [0, 0], sizes = [1, 128], strides = [1, 1]} : vector<2x128xf32> to vector<1x128xf32>
    %cst_31 = arith.constant 0.001953125 : f32
    %87 = vector.broadcast %cst_31 : f32 to vector<1x128xf32>
    %88 = arith.mulf %86, %87 : vector<1x128xf32>
    %89 = vector.extract_strided_slice %85 {offsets = [1, 0], sizes = [1, 128], strides = [1, 1]} : vector<2x128xf32> to vector<1x128xf32>
    %cst_32 = arith.constant 0.001953125 : f32
    %90 = vector.broadcast %cst_32 : f32 to vector<1x128xf32>
    %91 = arith.mulf %89, %90 : vector<1x128xf32>
    %92 = arith.mulf %88, %88 : vector<1x128xf32>
    %93 = arith.subf %91, %92 : vector<1x128xf32>
    %c0_33 = arith.constant 0 : index
    %c0_34 = arith.constant 0 : index
    %94 = vector.load %arg2[%c0_33, %c0_34] : memref<2x128xf32, #tpu.memory_space<vmem>>, vector<1x128xf32>
    %cst_35 = arith.constant 9.99999974E-6 : f32
    %95 = vector.broadcast %cst_35 : f32 to vector<1x128xf32>
    %96 = arith.addf %93, %95 : vector<1x128xf32>
    %97 = math.rsqrt %96 : vector<1x128xf32>
    %98 = arith.mulf %94, %97 : vector<1x128xf32>
    %c1_36 = arith.constant 1 : index
    %c0_37 = arith.constant 0 : index
    %99 = vector.load %arg2[%c1_36, %c0_37] : memref<2x128xf32, #tpu.memory_space<vmem>>, vector<1x128xf32>
    %100 = arith.mulf %88, %98 : vector<1x128xf32>
    %101 = arith.subf %99, %100 : vector<1x128xf32>
    %102 = vector.broadcast %98 : vector<1x128xf32> to vector<32x128xf32>
    %103 = arith.mulf %78, %102 : vector<32x128xf32>
    %104 = vector.broadcast %101 : vector<1x128xf32> to vector<32x128xf32>
    %105 = arith.addf %103, %104 : vector<32x128xf32>
    %cst_38 = arith.constant 0.000000e+00 : f32
    %106 = vector.broadcast %cst_38 : f32 to vector<32x128xf32>
    %107 = arith.maximumf %105, %106 : vector<32x128xf32>
    %c1_i32_39 = arith.constant 1 : i32
    %108 = tpu.dynamic_rotate %107 by %c1_i32_39 dim 0 : vector<32x128xf32>, i32 -> vector<32x128xf32>
    %cst_40 = arith.constant 0.000000e+00 : f32
    %109 = vector.broadcast %cst_40 : f32 to vector<32x128xf32>
    %110 = arith.select %18, %108, %109 : vector<32x128xi1>, vector<32x128xf32>
    %c31_i32_41 = arith.constant 31 : i32
    %111 = tpu.dynamic_rotate %107 by %c31_i32_41 dim 0 : vector<32x128xf32>, i32 -> vector<32x128xf32>
    %cst_42 = arith.constant 0.000000e+00 : f32
    %112 = vector.broadcast %cst_42 : f32 to vector<32x128xf32>
    %113 = arith.select %20, %111, %112 : vector<32x128xi1>, vector<32x128xf32>
    %114 = arith.truncf %110 : vector<32x128xf32> to vector<32x128xbf16>
    %c0_43 = arith.constant 0 : index
    %c0_44 = arith.constant 0 : index
    %c0_45 = arith.constant 0 : index
    %115 = vector.load %arg3[%c0_43, %c0_44, %c0_45] : memref<3x128x128xbf16, #tpu.memory_space<vmem>>, vector<1x128x128xbf16>
    %116 = vector.shape_cast %115 : vector<1x128x128xbf16> to vector<128x128xbf16>
    %cst_46 = arith.constant dense<0.000000e+00> : vector<32x128xf32>
    %117 = tpu.matmul %114, %116, %cst_46 {dimension_numbers = #tpu.dot_dimension_numbers<[1], [0], [0], [1], [0, 0, 1, 1], [], []>} : vector<32x128xbf16>, vector<128x128xbf16>, vector<32x128xf32> -> vector<32x128xf32>
    %118 = arith.truncf %107 : vector<32x128xf32> to vector<32x128xbf16>
    %c1_47 = arith.constant 1 : index
    %c0_48 = arith.constant 0 : index
    %c0_49 = arith.constant 0 : index
    %119 = vector.load %arg3[%c1_47, %c0_48, %c0_49] : memref<3x128x128xbf16, #tpu.memory_space<vmem>>, vector<1x128x128xbf16>
    %120 = vector.shape_cast %119 : vector<1x128x128xbf16> to vector<128x128xbf16>
    %cst_50 = arith.constant dense<0.000000e+00> : vector<32x128xf32>
    %121 = tpu.matmul %118, %120, %cst_50 {dimension_numbers = #tpu.dot_dimension_numbers<[1], [0], [0], [1], [0, 0, 1, 1], [], []>} : vector<32x128xbf16>, vector<128x128xbf16>, vector<32x128xf32> -> vector<32x128xf32>
    %122 = arith.addf %117, %121 : vector<32x128xf32>
    %123 = arith.truncf %113 : vector<32x128xf32> to vector<32x128xbf16>
    %c2_51 = arith.constant 2 : index
    %c0_52 = arith.constant 0 : index
    %c0_53 = arith.constant 0 : index
    %124 = vector.load %arg3[%c2_51, %c0_52, %c0_53] : memref<3x128x128xbf16, #tpu.memory_space<vmem>>, vector<1x128x128xbf16>
    %125 = vector.shape_cast %124 : vector<1x128x128xbf16> to vector<128x128xbf16>
    %cst_54 = arith.constant dense<0.000000e+00> : vector<32x128xf32>
    %126 = tpu.matmul %123, %125, %cst_54 {dimension_numbers = #tpu.dot_dimension_numbers<[1], [0], [0], [1], [0, 0, 1, 1], [], []>} : vector<32x128xbf16>, vector<128x128xbf16>, vector<32x128xf32> -> vector<32x128xf32>
    %127 = arith.addf %122, %126 : vector<32x128xf32>
    %cst_55 = arith.constant dense<0.000000e+00> : vector<128xf32>
    %128 = vector.multi_reduction <add>, %127, %cst_55 [0] : vector<32x128xf32> to vector<128xf32>
    %129 = vector.shape_cast %128 : vector<128xf32> to vector<1x128xf32>
    %130 = arith.mulf %127, %127 : vector<32x128xf32>
    %cst_56 = arith.constant dense<0.000000e+00> : vector<128xf32>
    %131 = vector.multi_reduction <add>, %130, %cst_56 [0] : vector<32x128xf32> to vector<128xf32>
    %132 = vector.shape_cast %131 : vector<128xf32> to vector<1x128xf32>
    %133 = tpu.concatenate %129, %132 in 0 : vector<1x128xf32>, vector<1x128xf32> -> vector<2x128xf32>
    %cst_57 = arith.constant dense<0.000000e+00> : vector<2x128xf32>
    %134 = tpu.matmul %133, %57, %cst_57 {dimension_numbers = #tpu.dot_dimension_numbers<[1], [0], [0], [1], [0, 0, 1, 1], [], []>} : vector<2x128xf32>, vector<128x128xf32>, vector<2x128xf32> -> vector<2x128xf32>
    %135 = vector.extract_strided_slice %134 {offsets = [0, 0], sizes = [1, 128], strides = [1, 1]} : vector<2x128xf32> to vector<1x128xf32>
    %cst_58 = arith.constant 0.001953125 : f32
    %136 = vector.broadcast %cst_58 : f32 to vector<1x128xf32>
    %137 = arith.mulf %135, %136 : vector<1x128xf32>
    %138 = vector.extract_strided_slice %134 {offsets = [1, 0], sizes = [1, 128], strides = [1, 1]} : vector<2x128xf32> to vector<1x128xf32>
    %cst_59 = arith.constant 0.001953125 : f32
    %139 = vector.broadcast %cst_59 : f32 to vector<1x128xf32>
    %140 = arith.mulf %138, %139 : vector<1x128xf32>
    %141 = arith.mulf %137, %137 : vector<1x128xf32>
    %142 = arith.subf %140, %141 : vector<1x128xf32>
    %c0_60 = arith.constant 0 : index
    %c0_61 = arith.constant 0 : index
    %143 = vector.load %arg4[%c0_60, %c0_61] : memref<2x128xf32, #tpu.memory_space<vmem>>, vector<1x128xf32>
    %cst_62 = arith.constant 9.99999974E-6 : f32
    %144 = vector.broadcast %cst_62 : f32 to vector<1x128xf32>
    %145 = arith.addf %142, %144 : vector<1x128xf32>
    %146 = math.rsqrt %145 : vector<1x128xf32>
    %147 = arith.mulf %143, %146 : vector<1x128xf32>
    %c1_63 = arith.constant 1 : index
    %c0_64 = arith.constant 0 : index
    %148 = vector.load %arg4[%c1_63, %c0_64] : memref<2x128xf32, #tpu.memory_space<vmem>>, vector<1x128xf32>
    %149 = arith.mulf %137, %147 : vector<1x128xf32>
    %150 = arith.subf %148, %149 : vector<1x128xf32>
    %151 = vector.broadcast %147 : vector<1x128xf32> to vector<32x128xf32>
    %152 = arith.mulf %127, %151 : vector<32x128xf32>
    %153 = vector.broadcast %150 : vector<1x128xf32> to vector<32x128xf32>
    %154 = arith.addf %152, %153 : vector<32x128xf32>
    %c0_65 = arith.constant 0 : index
    %c0_66 = arith.constant 0 : index
    %155 = vector.load %arg0[%c0_65, %c0_66] : memref<32x128xf32, #tpu.memory_space<vmem>>, vector<32x128xf32>
    %156 = arith.addf %154, %155 : vector<32x128xf32>
    %cst_67 = arith.constant 0.000000e+00 : f32
    %157 = vector.broadcast %cst_67 : f32 to vector<32x128xf32>
    %158 = arith.maximumf %156, %157 : vector<32x128xf32>
    %c0_68 = arith.constant 0 : index
    %c0_69 = arith.constant 0 : index
    %159 = vector.load %arg5[%c0_68, %c0_69] : memref<32x128xf32, #tpu.memory_space<vmem>>, vector<32x128xf32>
    tpu.vector_store %arg5[%c0_68, %c0_69], %158 {strides = array<i32>} : memref<32x128xf32, #tpu.memory_space<vmem>>, vector<32x128xf32>,
    return
  }
}

</mosaic_0001>

<llo_original>
// kernel: tile.23
$region0: #{tile.23}
  #allocation0 [shape = 's32[1]{0}', space=sflag, size = 0x4, scoped, tag = 'scoped memory for tile.23']
  %s0 = inlined_call_operand.vmem [shape: f32[8], index: 0, kind: input, shape index: {}]
  %s1 = inlined_call_operand.vmem [shape: f32[16,8], index: 1, kind: output, shape index: {}]
  // Predicated region
  $region2: #{tile.23} parent=0 // pred_check
    _
  $region3: #{tile.23} parent=0 // pred_check_branch
    %3 = sbr.rel (0) target = $region5
  $region4: #{tile.23} parent=0 // pred_region
    _
  $region5: #{tile.23} parent=0 // pred_fallthru
    _
  %v4 = vld [vmem:[%s0] ss:$0 sm:$0xff]
  %5 = vst [vmem:[%s1] sm:$0xff] %v4
  %s6 = scalar_lea.vmem %s1, 8
  %7 = vst [vmem:[%s6] sm:$0xff] %v4

// kernel: tile.28
$region0: #{tile.28}
  %s0 = inlined_call_operand.vmem [shape: f32[16,8], index: 0, kind: input, shape index: {}]
  %s1 = inlined_call_operand.vmem [shape: f32[1,128], index: 1, kind: output, shape index: {}]
  $region1: #{tile.28} parent=0
    #allocation0 [shape = 'u8[4096]{0}', space=vmem, size = 0x1000, scoped, tag = 'scoped mem for output reshape']
    %v2 = vld [vmem:[%s0] sm:$0x1]
    %vm3 = vcmask 64512
    %4 = vst.msk [vmem:[#allocation0] sm:$0x1] %vm3, %v2
    %s5 = scalar_lea.vmem %s0, 15
    %v6 = vld [vmem:[%s5] sm:$0x1]
    %7 = vrot.lane.b32.xlu0 %v6, 120
    %v8 = vpop.permute.xlu0 %7
    %vm9 = vcmask 1048512
    %10 = vst.msk [vmem:[#allocation0] sm:$0x1] %vm9, %v8
    %s11 = scalar_lea.vmem %s0, 14
    %v12 = vld [vmem:[%s11] sm:$0x1]
    %13 = vrot.lane.b32.xlu0 %v12, 112
    %v14 = vpop.permute.xlu0 %13
    %vm15 = vcmask 982912
    %16 = vst.msk [vmem:[#allocation0] sm:$0x1] %vm15, %v14
    %s17 = scalar_lea.vmem %s0, 13
    %v18 = vld [vmem:[%s17] sm:$0x1]
    %19 = vrot.lane.b32.xlu0 %v18, 104
    %v20 = vpop.permute.xlu0 %19
    %vm21 = vcmask 917312
    %22 = vst.msk [vmem:[#allocation0] sm:$0x1] %vm21, %v20
    %s23 = scalar_lea.vmem %s0, 12
    %v24 = vld [vmem:[%s23] sm:$0x1]
    %25 = vrot.lane.b32.xlu0 %v24, 96
    %v26 = vpop.permute.xlu0 %25
    %vm27 = vcmask 851712
    %28 = vst.msk [vmem:[#allocation0] sm:$0x1] %vm27, %v26
    %s29 = scalar_lea.vmem %s0, 11
    %v30 = vld [vmem:[%s29] sm:$0x1]
    %31 = vrot.lane.b32.xlu0 %v30, 88
    %v32 = vpop.permute.xlu0 %31
    %vm33 = vcmask 786112
    %34 = vst.msk [vmem:[#allocation0] sm:$0x1] %vm33, %v32
    %s35 = scalar_lea.vmem %s0, 10
    %v36 = vld [vmem:[%s35] sm:$0x1]
    %37 = vrot.lane.b32.xlu0 %v36, 80
    %v38 = vpop.permute.xlu0 %37
    %vm39 = vcmask 720512
    %40 = vst.msk [vmem:[#allocation0] sm:$0x1] %vm39, %v38
    %s41 = scalar_lea.vmem %s0, 9
    %v42 = vld [vmem:[%s41] sm:$0x1]
    %43 = vrot.lane.b32.xlu0 %v42, 72
    %v44 = vpop.permute.xlu0 %43
    %vm45 = vcmask 654912
    %46 = vst.msk [vmem:[#allocation0] sm:$0x1] %vm45, %v44
    %s47 = scalar_lea.vmem %s0, 8
    %v48 = vld [vmem:[%s47] sm:$0x1]
    %49 = vrot.lane.b32.xlu0 %v48, 64
    %v50 = vpop.permute.xlu0 %49
    %vm51 = vcmask 589312
    %52 = vst.msk [vmem:[#allocation0] sm:$0x1] %vm51, %v50
    %s53 = scalar_lea.vmem %s0, 7
    %v54 = vld [vmem:[%s53] sm:$0x1]
    %55 = vrot.lane.b32.xlu0 %v54, 56
    %v56 = vpop.permute.xlu0 %55
    %vm57 = vcmask 523712
    %58 = vst.msk [vmem:[#allocation0] sm:$0x1] %vm57, %v56
    %s59 = scalar_lea.vmem %s0, 6
    %v60 = vld [vmem:[%s59] sm:$0x1]
    %61 = vrot.lane.b32.xlu0 %v60, 48
    %v62 = vpop.permute.xlu0 %61
    %vm63 = vcmask 458112
    %64 = vst.msk [vmem:[#allocation0] sm:$0x1] %vm63, %v62
    %s65 = scalar_lea.vmem %s0, 5
    %v66 = vld [vmem:[%s65] sm:$0x1]
    %67 = vrot.lane.b32.xlu0 %v66, 40
    %v68 = vpop.permute.xlu0 %67
    %vm69 = vcmask 392512
    %70 = vst.msk [vmem:[#allocation0] sm:$0x1] %vm69, %v68
    %s71 = scalar_lea.vmem %s0, 4
    %v72 = vld [vmem:[%s71] sm:$0x1]
    %73 = vrot.lane.b32.xlu0 %v72, 32
    %v74 = vpop.permute.xlu0 %73
    %vm75 = vcmask 326912
    %76 = vst.msk [vmem:[#allocation0] sm:$0x1] %vm75, %v74
    %s77 = scalar_lea.vmem %s0, 3
    %v78 = vld [vmem:[%s77] sm:$0x1]
    %79 = vrot.lane.b32.xlu0 %v78, 24
    %v80 = vpop.permute.xlu0 %79
    %vm81 = vcmask 261312
    %82 = vst.msk [vmem:[#allocation0] sm:$0x1] %vm81, %v80
    %s83 = scalar_lea.vmem %s0, 2
    %v84 = vld [vmem:[%s83] sm:$0x1]
    %85 = vrot.lane.b32.xlu0 %v84, 16
    %v86 = vpop.permute.xlu0 %85
    %vm87 = vcmask 195712
    %88 = vst.msk [vmem:[#allocation0] sm:$0x1] %vm87, %v86
    %s89 = scalar_lea.vmem %s0, 1
    %v90 = vld [vmem:[%s89] sm:$0x1]
    %91 = vrot.lane.b32.xlu0 %v90, 8
    %v92 = vpop.permute.xlu0 %91
    %vm93 = vcmask 130112
    %94 = vst.msk [vmem:[#allocation0] sm:$0x1] %vm93, %v92
    %s96 = sshllo.u32 0, 1
    %v98 = vld [vmem:[#allocation0] sm:%s96]
    %s99 = sshllo.u32 0, 1
    %100 = vst [vmem:[%s1] sm:%s99] %v98

// kernel: residual_block_forward.1
$region0: #{residual_block_forward.1}
  #allocation0 [shape = 'u32[]', space=smem, size = 0x4, offset = 0x4, fixed_abs, tag = 'smem constant byte address 0x4 - core index']
  #allocation1 [shape = 'u32[144,128]{1,0:T(1,128)}', space=vmem, size = 0x12000, scoped, tag = 'internal scratch']
  %s0 = inlined_call_operand.vmem [shape: f32[32,128], index: 0, kind: input, shape index: {}]
  %s1 = inlined_call_operand.vmem [shape: bf16[3,128,128], index: 1, kind: input, shape index: {}]
  %s2 = inlined_call_operand.vmem [shape: f32[2,128], index: 2, kind: input, shape index: {}]
  %s3 = inlined_call_operand.vmem [shape: bf16[3,128,128], index: 3, kind: input, shape index: {}]
  %s4 = inlined_call_operand.vmem [shape: f32[2,128], index: 4, kind: input, shape index: {}]
  %s5 = inlined_call_operand.vmem [shape: f32[32,128], index: 5, kind: output, shape index: {}]
  %s6 = sld [smem:[#allocation0]]
  $region30: #{residual_block_forward.1} parent=0
    _
  %s8 = ssub.s32 1, %s6
  %s9 = scalar_select 0, %s8, %s6
  // Predicated region
  $region2: #{residual_block_forward.1} parent=0 // pred_check
    _
  $region3: #{residual_block_forward.1} parent=0 // pred_check_branch
    %11 = sbr.rel (0) target = $region5
  $region4: #{residual_block_forward.1} parent=0 // pred_region
    _
  $region5: #{residual_block_forward.1} parent=0 // pred_fallthru
    _
  // Predicated region
  $region6: #{residual_block_forward.1} parent=0 // pred_check
    _
  $region7: #{residual_block_forward.1} parent=0 // pred_check_branch
    %13 = sbr.rel (0) target = $region9
  $region8: #{residual_block_forward.1} parent=0 // pred_region
    _
  $region9: #{residual_block_forward.1} parent=0 // pred_fallthru
    _
  // Predicated region
  $region10: #{residual_block_forward.1} parent=0 // pred_check
    _
  $region11: #{residual_block_forward.1} parent=0 // pred_check_branch
    %15 = sbr.rel (0) target = $region13
  $region12: #{residual_block_forward.1} parent=0 // pred_region
    _
  $region13: #{residual_block_forward.1} parent=0 // pred_fallthru
    _
  // Predicated region
  $region14: #{residual_block_forward.1} parent=0 // pred_check
    _
  $region15: #{residual_block_forward.1} parent=0 // pred_check_branch
    %17 = sbr.rel (0) target = $region17
  $region16: #{residual_block_forward.1} parent=0 // pred_region
    _
  $region17: #{residual_block_forward.1} parent=0 // pred_fallthru
    _
  // Predicated region
  $region18: #{residual_block_forward.1} parent=0 // pred_check
    _
  $region19: #{residual_block_forward.1} parent=0 // pred_check_branch
    %19 = sbr.rel (0) target = $region21
  $region20: #{residual_block_forward.1} parent=0 // pred_region
    _
  $region21: #{residual_block_forward.1} parent=0 // pred_fallthru
    _
  %v21 = vlaneseq
  %v22 = vshrl.u32 %v21, 7
  %v23 = vadd.s32 %v22, 8
  %v24 = vadd.s32 %v22, 16
  %v25 = vadd.s32 %v22, 24
  %vm26 = vcmp.lt.s32.totalorder %v22, 0
  %v27 = vsub.s32 0, %v22
  %v28 = vsel %vm26, %v27, %v22
  %v29 = vshrl.u32 %v28, 4
  %v30 = vand.u32 %v28, 15
  %v31 = vsub.s32 0, %v30
  %v32 = vsel %vm26, %v31, %v30
  %vm33 = vcmp.lt.s32.totalorder %v23, 0
  %v34 = vsub.s32 0, %v23
  %v35 = vsel %vm33, %v34, %v23
  %v36 = vshrl.u32 %v35, 4
  %v37 = vand.u32 %v35, 15
  %v38 = vsub.s32 0, %v37
  %v39 = vsel %vm33, %v38, %v37
  %vm40 = vcmp.lt.s32.totalorder %v24, 0
  %v41 = vsub.s32 0, %v24
  %v42 = vsel %vm40, %v41, %v24
  %v43 = vshrl.u32 %v42, 4
  %v44 = vand.u32 %v42, 15
  %v45 = vsub.s32 0, %v44
  %v46 = vsel %vm40, %v45, %v44
  %vm47 = vcmp.lt.s32.totalorder %v25, 0
  %v48 = vsub.s32 0, %v25
  %v49 = vsel %vm47, %v48, %v25
  %v50 = vshrl.u32 %v49, 4
  %v51 = vand.u32 %v49, 15
  %v52 = vsub.s32 0, %v51
  %v53 = vsel %vm47, %v52, %v51
  %vm54 = vcmp.ne.s32.totalorder %v32, 0
  %vm55 = vcmp.ne.s32.totalorder %v39, 0
  %vm56 = vcmp.ne.s32.totalorder %v46, 0
  %vm57 = vcmp.ne.s32.totalorder %v53, 0
  %vm58 = vcmp.lt.s32.totalorder %v32, 0
  %vm59 = vcmp.lt.s32.totalorder %v39, 0
  %vm60 = vcmp.lt.s32.totalorder %v46, 0
  %vm61 = vcmp.lt.s32.totalorder %v53, 0
  %vm62 = vmand %vm58, %vm54
  %vm63 = vmand %vm59, %vm55
  %vm64 = vmand %vm60, %vm56
  %vm65 = vmand %vm61, %vm57
  %v66 = vadd.s32 %v32, 16
  %v67 = vadd.s32 %v39, 16
  %v68 = vadd.s32 %v46, 16
  %v69 = vadd.s32 %v53, 16
  %v70 = vsel %vm62, %v66, %v32
  %v71 = vsel %vm63, %v67, %v39
  %v72 = vsel %vm64, %v68, %v46
  %v73 = vsel %vm65, %v69, %v53
  %vm74 = vcmp.ne.s32.totalorder %v70, 0
  %vm75 = vcmp.ne.s32.totalorder %v71, 0
  %vm76 = vcmp.ne.s32.totalorder %v72, 0
  %vm77 = vcmp.ne.s32.totalorder %v73, 0
  %vm78 = vcmp.ne.s32.totalorder %v70, 15
  %vm79 = vcmp.ne.s32.totalorder %v71, 15
  %vm80 = vcmp.ne.s32.totalorder %v72, 15
  %vm81 = vcmp.ne.s32.totalorder %v73, 15
  %v82 = vadd.s32 %v22, 32
  %v83 = vadd.s32 %v22, 40
  %v84 = vadd.s32 %v22, 48
  %v85 = vadd.s32 %v22, 56
  %v86 = vadd.s32 %v22, 64
  %v87 = vadd.s32 %v22, 72
  %v88 = vadd.s32 %v22, 80
  %v89 = vadd.s32 %v22, 88
  %v90 = vadd.s32 %v22, 96
  %v91 = vadd.s32 %v22, 104
  %v92 = vadd.s32 %v22, 112
  %v93 = vadd.s32 %v22, 120
  %vm94 = vcmp.lt.s32.totalorder %v22, 0
  %v95 = vsub.s32 0, %v22
  %v96 = vsel %vm94, %v95, %v22
  %v97 = vshrl.u32 %v96, 3
  %v98 = vand.u32 %v96, 7
  %v99 = vsub.s32 0, %v98
  %v100 = vsel %vm94, %v99, %v98
  %vm101 = vcmp.lt.s32.totalorder %v23, 0
  %v102 = vsub.s32 0, %v23
  %v103 = vsel %vm101, %v102, %v23
  %v104 = vshrl.u32 %v103, 3
  %v105 = vand.u32 %v103, 7
  %v106 = vsub.s32 0, %v105
  %v107 = vsel %vm101, %v106, %v105
  %vm108 = vcmp.lt.s32.totalorder %v24, 0
  %v109 = vsub.s32 0, %v24
  %v110 = vsel %vm108, %v109, %v24
  %v111 = vshrl.u32 %v110, 3
  %v112 = vand.u32 %v110, 7
  %v113 = vsub.s32 0, %v112
  %v114 = vsel %vm108, %v113, %v112
  %vm115 = vcmp.lt.s32.totalorder %v25, 0
  %v116 = vsub.s32 0, %v25
  %v117 = vsel %vm115, %v116, %v25
  %v118 = vshrl.u32 %v117, 3
  %v119 = vand.u32 %v117, 7
  %v120 = vsub.s32 0, %v119
  %v121 = vsel %vm115, %v120, %v119
  %vm122 = vcmp.lt.s32.totalorder %v82, 0
  %v123 = vsub.s32 0, %v82
  %v124 = vsel %vm122, %v123, %v82
  %v125 = vshrl.u32 %v124, 3
  %v126 = vand.u32 %v124, 7
  %v127 = vsub.s32 0, %v126
  %v128 = vsel %vm122, %v127, %v126
  %vm129 = vcmp.lt.s32.totalorder %v83, 0
  %v130 = vsub.s32 0, %v83
  %v131 = vsel %vm129, %v130, %v83
  %v132 = vshrl.u32 %v131, 3
  %v133 = vand.u32 %v131, 7
  %v134 = vsub.s32 0, %v133
  %v135 = vsel %vm129, %v134, %v133
  %vm136 = vcmp.lt.s32.totalorder %v84, 0
  %v137 = vsub.s32 0, %v84
  %v138 = vsel %vm136, %v137, %v84
  %v139 = vshrl.u32 %v138, 3
  %v140 = vand.u32 %v138, 7
  %v141 = vsub.s32 0, %v140
  %v142 = vsel %vm136, %v141, %v140
  %vm143 = vcmp.lt.s32.totalorder %v85, 0
  %v144 = vsub.s32 0, %v85
  %v145 = vsel %vm143, %v144, %v85
  %v146 = vshrl.u32 %v145, 3
  %v147 = vand.u32 %v145, 7
  %v148 = vsub.s32 0, %v147
  %v149 = vsel %vm143, %v148, %v147
  %vm150 = vcmp.lt.s32.totalorder %v86, 0
  %v151 = vsub.s32 0, %v86
  %v152 = vsel %vm150, %v151, %v86
  %v153 = vshrl.u32 %v152, 3
  %v154 = vand.u32 %v152, 7
  %v155 = vsub.s32 0, %v154
  %v156 = vsel %vm150, %v155, %v154
  %vm157 = vcmp.lt.s32.totalorder %v87, 0
  %v158 = vsub.s32 0, %v87
  %v159 = vsel %vm157, %v158, %v87
  %v160 = vshrl.u32 %v159, 3
  %v161 = vand.u32 %v159, 7
  %v162 = vsub.s32 0, %v161
  %v163 = vsel %vm157, %v162, %v161
  %vm164 = vcmp.lt.s32.totalorder %v88, 0
  %v165 = vsub.s32 0, %v88
  %v166 = vsel %vm164, %v165, %v88
  %v167 = vshrl.u32 %v166, 3
  %v168 = vand.u32 %v166, 7
  %v169 = vsub.s32 0, %v168
  %v170 = vsel %vm164, %v169, %v168
  %vm171 = vcmp.lt.s32.totalorder %v89, 0
  %v172 = vsub.s32 0, %v89
  %v173 = vsel %vm171, %v172, %v89
  %v174 = vshrl.u32 %v173, 3
  %v175 = vand.u32 %v173, 7
  %v176 = vsub.s32 0, %v175
  %v177 = vsel %vm171, %v176, %v175
  %vm178 = vcmp.lt.s32.totalorder %v90, 0
  %v179 = vsub.s32 0, %v90
  %v180 = vsel %vm178, %v179, %v90
  %v181 = vshrl.u32 %v180, 3
  %v182 = vand.u32 %v180, 7
  %v183 = vsub.s32 0, %v182
  %v184 = vsel %vm178, %v183, %v182
  %vm185 = vcmp.lt.s32.totalorder %v91, 0
  %v186 = vsub.s32 0, %v91
  %v187 = vsel %vm185, %v186, %v91
  %v188 = vshrl.u32 %v187, 3
  %v189 = vand.u32 %v187, 7
  %v190 = vsub.s32 0, %v189
  %v191 = vsel %vm185, %v190, %v189
  %vm192 = vcmp.lt.s32.totalorder %v92, 0
  %v193 = vsub.s32 0, %v92
  %v194 = vsel %vm192, %v193, %v92
  %v195 = vshrl.u32 %v194, 3
  %v196 = vand.u32 %v194, 7
  %v197 = vsub.s32 0, %v196
  %v198 = vsel %vm192, %v197, %v196
  %vm199 = vcmp.lt.s32.totalorder %v93, 0
  %v200 = vsub.s32 0, %v93
  %v201 = vsel %vm199, %v200, %v93
  %v202 = vshrl.u32 %v201, 3
  %v203 = vand.u32 %v201, 7
  %v204 = vsub.s32 0, %v203
  %v205 = vsel %vm199, %v204, %v203
  %vm206 = vcmp.ne.s32.totalorder %v100, 0
  %vm207 = vcmp.ne.s32.totalorder %v107, 0
  %vm208 = vcmp.ne.s32.totalorder %v114, 0
  %vm209 = vcmp.ne.s32.totalorder %v121, 0
  %vm210 = vcmp.ne.s32.totalorder %v128, 0
  %vm211 = vcmp.ne.s32.totalorder %v135, 0
  %vm212 = vcmp.ne.s32.totalorder %v142, 0
  %vm213 = vcmp.ne.s32.totalorder %v149, 0
  %vm214 = vcmp.ne.s32.totalorder %v156, 0
  %vm215 = vcmp.ne.s32.totalorder %v163, 0
  %vm216 = vcmp.ne.s32.totalorder %v170, 0
  %vm217 = vcmp.ne.s32.totalorder %v177, 0
  %vm218 = vcmp.ne.s32.totalorder %v184, 0
  %vm219 = vcmp.ne.s32.totalorder %v191, 0
  %vm220 = vcmp.ne.s32.totalorder %v198, 0
  %vm221 = vcmp.ne.s32.totalorder %v205, 0
  %vm222 = vcmp.lt.s32.totalorder %v100, 0
  %vm223 = vcmp.lt.s32.totalorder %v107, 0
  %vm224 = vcmp.lt.s32.totalorder %v114, 0
  %vm225 = vcmp.lt.s32.totalorder %v121, 0
  %vm226 = vcmp.lt.s32.totalorder %v128, 0
  %vm227 = vcmp.lt.s32.totalorder %v135, 0
  %vm228 = vcmp.lt.s32.totalorder %v142, 0
  %vm229 = vcmp.lt.s32.totalorder %v149, 0
  %vm230 = vcmp.lt.s32.totalorder %v156, 0
  %vm231 = vcmp.lt.s32.totalorder %v163, 0
  %vm232 = vcmp.lt.s32.totalorder %v170, 0
  %vm233 = vcmp.lt.s32.totalorder %v177, 0
  %vm234 = vcmp.lt.s32.totalorder %v184, 0
  %vm235 = vcmp.lt.s32.totalorder %v191, 0
  %vm236 = vcmp.lt.s32.totalorder %v198, 0
  %vm237 = vcmp.lt.s32.totalorder %v205, 0
  %vm238 = vmand %vm222, %vm206
  %vm239 = vmand %vm223, %vm207
  %vm240 = vmand %vm224, %vm208
  %vm241 = vmand %vm225, %vm209
  %vm242 = vmand %vm226, %vm210
  %vm243 = vmand %vm227, %vm211
  %vm244 = vmand %vm228, %vm212
  %vm245 = vmand %vm229, %vm213
  %vm246 = vmand %vm230, %vm214
  %vm247 = vmand %vm231, %vm215
  %vm248 = vmand %vm232, %vm216
  %vm249 = vmand %vm233, %vm217
  %vm250 = vmand %vm234, %vm218
  %vm251 = vmand %vm235, %vm219
  %vm252 = vmand %vm236, %vm220
  %vm253 = vmand %vm237, %vm221
  %v254 = vadd.s32 %v100, 8
  %v255 = vadd.s32 %v107, 8
  %v256 = vadd.s32 %v114, 8
  %v257 = vadd.s32 %v121, 8
  %v258 = vadd.s32 %v128, 8
  %v259 = vadd.s32 %v135, 8
  %v260 = vadd.s32 %v142, 8
  %v261 = vadd.s32 %v149, 8
  %v262 = vadd.s32 %v156, 8
  %v263 = vadd.s32 %v163, 8
  %v264 = vadd.s32 %v170, 8
  %v265 = vadd.s32 %v177, 8
  %v266 = vadd.s32 %v184, 8
  %v267 = vadd.s32 %v191, 8
  %v268 = vadd.s32 %v198, 8
  %v269 = vadd.s32 %v205, 8
  %v270 = vsel %vm238, %v254, %v100
  %v271 = vsel %vm239, %v255, %v107
  %v272 = vsel %vm240, %v256, %v114
  %v273 = vsel %vm241, %v257, %v121
  %v274 = vsel %vm242, %v258, %v128
  %v275 = vsel %vm243, %v259, %v135
  %v276 = vsel %vm244, %v260, %v142
  %v277 = vsel %vm245, %v261, %v149
  %v278 = vsel %vm246, %v262, %v156
  %v279 = vsel %vm247, %v263, %v163
  %v280 = vsel %vm248, %v264, %v170
  %v281 = vsel %vm249, %v265, %v177
  %v282 = vsel %vm250, %v266, %v184
  %v283 = vsel %vm251, %v267, %v191
  %v284 = vsel %vm252, %v268, %v198
  %v285 = vsel %vm253, %v269, %v205
  %v286 = vlaneseq
  %v287 = vand.u32 %v286, 127
  %vm288 = vcmp.lt.s32.totalorder %v287, 0
  %v289 = vsub.s32 0, %v287
  %v290 = vsel %vm288, %v289, %v287
  %v291 = vshrl.u32 %v290, 3
  %v292 = vand.u32 %v290, 7
  %v293 = vsub.s32 0, %v292
  %v294 = vsel %vm288, %v293, %v292
  %vm295 = vcmp.ne.s32.totalorder %v294, 0
  %vm296 = vcmp.lt.s32.totalorder %v294, 0
  %vm297 = vmand %vm296, %vm295
  %v298 = vadd.s32 %v294, 8
  %v299 = vsel %vm297, %v298, %v294
  %vm300 = vcmp.eq.s32.totalorder %v270, %v299
  %vm301 = vcmp.eq.s32.totalorder %v271, %v299
  %vm302 = vcmp.eq.s32.totalorder %v272, %v299
  %vm303 = vcmp.eq.s32.totalorder %v273, %v299
  %vm304 = vcmp.eq.s32.totalorder %v274, %v299
  %vm305 = vcmp.eq.s32.totalorder %v275, %v299
  %vm306 = vcmp.eq.s32.totalorder %v276, %v299
  %vm307 = vcmp.eq.s32.totalorder %v277, %v299
  %vm308 = vcmp.eq.s32.totalorder %v278, %v299
  %vm309 = vcmp.eq.s32.totalorder %v279, %v299
  %vm310 = vcmp.eq.s32.totalorder %v280, %v299
  %vm311 = vcmp.eq.s32.totalorder %v281, %v299
  %vm312 = vcmp.eq.s32.totalorder %v282, %v299
  %vm313 = vcmp.eq.s32.totalorder %v283, %v299
  %vm314 = vcmp.eq.s32.totalorder %v284, %v299
  %vm315 = vcmp.eq.s32.totalorder %v285, %v299
  %v316 = vsel %vm300, 1, 0
  %v317 = vsel %vm301, 1, 0
  %v318 = vsel %vm302, 1, 0
  %v319 = vsel %vm303, 1, 0
  %v320 = vsel %vm304, 1, 0
  %v321 = vsel %vm305, 1, 0
  %v322 = vsel %vm306, 1, 0
  %v323 = vsel %vm307, 1, 0
  %v324 = vsel %vm308, 1, 0
  %v325 = vsel %vm309, 1, 0
  %v326 = vsel %vm310, 1, 0
  %v327 = vsel %vm311, 1, 0
  %v328 = vsel %vm312, 1, 0
  %v329 = vsel %vm313, 1, 0
  %v330 = vsel %vm314, 1, 0
  %v331 = vsel %vm315, 1, 0
  %v332 = vcvt.s32.f32 %v316
  %v333 = vcvt.s32.f32 %v317
  %v334 = vcvt.s32.f32 %v318
  %v335 = vcvt.s32.f32 %v319
  %v336 = vcvt.s32.f32 %v320
  %v337 = vcvt.s32.f32 %v321
  %v338 = vcvt.s32.f32 %v322
  %v339 = vcvt.s32.f32 %v323
  %v340 = vcvt.s32.f32 %v324
  %v341 = vcvt.s32.f32 %v325
  %v342 = vcvt.s32.f32 %v326
  %v343 = vcvt.s32.f32 %v327
  %v344 = vcvt.s32.f32 %v328
  %v345 = vcvt.s32.f32 %v329
  %v346 = vcvt.s32.f32 %v330
  %v347 = vcvt.s32.f32 %v331
  %v348 = vld [vmem:[%s0] sm:$0xff]
  %v349 = vld [vmem:[%s0 + $0x8] sm:$0xff]
  %v350 = vld [vmem:[%s0 + $0x10] sm:$0xff]
  %v351 = vld [vmem:[%s0 + $0x18] sm:$0xff]
  %v352 = vrot.slane %v348, 7
  %v353 = vrot.slane %v349, 7
  %v354 = vrot.slane %v350, 7
  %v355 = vrot.slane %v351, 7
  %vm356 = vcmp.lt.s32.totalorder %v22, 1
  %v357 = vsel %vm356, %v354, %v355
  %v358 = vsel %vm356, %v353, %v354
  %v359 = vsel %vm356, %v352, %v353
  %v360 = vsel %vm356, %v355, %v352
  %v361 = vsel %vm74, %v360, 0.0
  %v362 = vsel %vm75, %v359, 0.0
  %v363 = vsel %vm76, %v358, 0.0
  %v364 = vsel %vm77, %v357, 0.0
  %v365 = vrot.slane %v348, 1
  %v366 = vrot.slane %v349, 1
  %v367 = vrot.slane %v350, 1
  %v368 = vrot.slane %v351, 1
  %vm369 = vcmp.lt.s32.totalorder %v22, 7
  %v370 = vsel %vm369, %v367, %v368
  %v371 = vsel %vm369, %v366, %v367
  %v372 = vsel %vm369, %v365, %v366
  %v373 = vsel %vm369, %v368, %v365
  %v374 = vsel %vm78, %v372, 0.0
  %v375 = vsel %vm79, %v371, 0.0
  %v376 = vsel %vm80, %v370, 0.0
  %v377 = vsel %vm81, %v373, 0.0
  %v378 = vpack.c.bf16 %v362, %v361
  %v379 = vpack.c.bf16 %v364, %v363
  %v380 = vld [vmem:[%s1] sm:$0xf]
  %v381 = vld [vmem:[%s1 + $0x4] sm:$0xf]
  %v382 = vld [vmem:[%s1 + $0x8] sm:$0xf]
  %v383 = vld [vmem:[%s1 + $0xc] sm:$0xf]
  %v384 = vld [vmem:[%s1 + $0x10] sm:$0xf]
  %v385 = vld [vmem:[%s1 + $0x14] sm:$0xf]
  %v386 = vld [vmem:[%s1 + $0x18] sm:$0xf]
  %v387 = vld [vmem:[%s1 + $0x1c] sm:$0xf]
  %v388 = vld [vmem:[%s1 + $0x20] sm:$0xf]
  %v389 = vld [vmem:[%s1 + $0x24] sm:$0xf]
  %v390 = vld [vmem:[%s1 + $0x28] sm:$0xf]
  %v391 = vld [vmem:[%s1 + $0x2c] sm:$0xf]
  %v392 = vld [vmem:[%s1 + $0x30] sm:$0xf]
  %v393 = vld [vmem:[%s1 + $0x34] sm:$0xf]
  %v394 = vld [vmem:[%s1 + $0x38] sm:$0xf]
  %v395 = vld [vmem:[%s1 + $0x3c] sm:$0xf]
  %v396 = vpack.c.bf16 %v349, %v348
  %v397 = vpack.c.bf16 %v351, %v350
  %s398 = scalar_lea.vmem %s1, 64
  %v399 = vld [vmem:[%s398] sm:$0xf]
  %v400 = vld [vmem:[%s398 + $0x4] sm:$0xf]
  %v401 = vld [vmem:[%s398 + $0x8] sm:$0xf]
  %v402 = vld [vmem:[%s398 + $0xc] sm:$0xf]
  %v403 = vld [vmem:[%s398 + $0x10] sm:$0xf]
  %v404 = vld [vmem:[%s398 + $0x14] sm:$0xf]
  %v405 = vld [vmem:[%s398 + $0x18] sm:$0xf]
  %v406 = vld [vmem:[%s398 + $0x1c] sm:$0xf]
  %v407 = vld [vmem:[%s398 + $0x20] sm:$0xf]
  %v408 = vld [vmem:[%s398 + $0x24] sm:$0xf]
  %v409 = vld [vmem:[%s398 + $0x28] sm:$0xf]
  %v410 = vld [vmem:[%s398 + $0x2c] sm:$0xf]
  %v411 = vld [vmem:[%s398 + $0x30] sm:$0xf]
  %v412 = vld [vmem:[%s398 + $0x34] sm:$0xf]
  %v413 = vld [vmem:[%s398 + $0x38] sm:$0xf]
  %v414 = vld [vmem:[%s398 + $0x3c] sm:$0xf]
  %v431 = vunpack.c.l.b16 %v399
  %v432 = vunpack.c.l.b16 %v400
  %v433 = vunpack.c.l.b16 %v401
  %v434 = vunpack.c.l.b16 %v402
  %v435 = vunpack.c.l.b16 %v403
  %v436 = vunpack.c.l.b16 %v404
  %v437 = vunpack.c.l.b16 %v405
  %v438 = vunpack.c.l.b16 %v406
  %v439 = vunpack.c.l.b16 %v407
  %v440 = vunpack.c.l.b16 %v408
  %v441 = vunpack.c.l.b16 %v409
  %v442 = vunpack.c.l.b16 %v410
  %v443 = vunpack.c.l.b16 %v411
  %v444 = vunpack.c.l.b16 %v412
  %v445 = vunpack.c.l.b16 %v413
  %v446 = vunpack.c.l.b16 %v414
  %v447 = vpack.c.b16 %v432, %v431
  %v448 = vpack.c.b16 %v434, %v433
  %v449 = vpack.c.b16 %v436, %v435
  %v450 = vpack.c.b16 %v438, %v437
  %v451 = vpack.c.b16 %v440, %v439
  %v452 = vpack.c.b16 %v442, %v441
  %v453 = vpack.c.b16 %v444, %v443
  %v454 = vpack.c.b16 %v446, %v445
  %463 = vmatprep.subr.bf16.mxu0 0
  %464 = vmatpush1.bf16.msra.mxu0 %v447
  %465 = vmatprep.subr.bf16.mxu0 0
  %466 = vmatpush1.bf16.msra.mxu0 %v448
  %467 = vmatprep.subr.bf16.mxu0 0
  %468 = vmatpush1.bf16.msra.mxu0 %v449
  %469 = vmatprep.subr.bf16.mxu0 0
  %470 = vmatpush1.bf16.msra.mxu0 %v450
  %471 = vmatprep.subr.bf16.mxu0 0
  %472 = vmatpush1.bf16.msra.mxu0 %v451
  %473 = vmatprep.subr.bf16.mxu0 0
  %474 = vmatpush1.bf16.msra.mxu0 %v452
  %475 = vmatprep.subr.bf16.mxu0 0
  %476 = vmatpush1.bf16.msra.mxu0 %v453
  %477 = vmatprep.subr.bf16.mxu0 0
  %478 = vmatpush1.bf16.msra.mxu0 %v454
  %479 = vmatprep.subr.bf16.mxu0 0
  %480 = vmatpush1.bf16.msra.mxu0 0
  %481 = vmatprep.subr.bf16.mxu0 0
  %482 = vmatpush1.bf16.msra.mxu0 0
  %483 = vmatprep.subr.bf16.mxu0 0
  %484 = vmatpush1.bf16.msra.mxu0 0
  %485 = vmatprep.subr.bf16.mxu0 0
  %486 = vmatpush1.bf16.msra.mxu0 0
  %487 = vmatprep.subr.bf16.mxu0 0
  %488 = vmatpush1.bf16.msra.mxu0 0
  %489 = vmatprep.subr.bf16.mxu0 0
  %490 = vmatpush1.bf16.msra.mxu0 0
  %491 = vmatprep.subr.bf16.mxu0 0
  %492 = vmatpush1.bf16.msra.mxu0 0
  %493 = vmatprep.subr.bf16.mxu0 0
  %494 = vmatpush1.bf16.msra.mxu0 0
  %495 = vmatprep.mubr.bf16.mxu0 0
  %496 = vmatmul.mubr.bf16.gmra.mrb[0].mxu0 %v396
  %v497 = vpop.f32.mrb[0].mxu0
  %v498 = vadd.f32 0.0, %v497
  %v499 = vpop.f32.mrb[0].mxu0
  %v500 = vpop.f32.mrb[0].mxu0
  %v501 = vadd.f32 0.0, %v500
  %v502 = vpop.f32.mrb[0].mxu0
  %503 = vmatprep.mubr.bf16.mxu0 0
  %504 = vmatmul.mubr.bf16.gmra.mrb[0].mxu0 %v397
  %v505 = vpop.f32.mrb[0].mxu0
  %v506 = vadd.f32 0.0, %v505
  %v507 = vpop.f32.mrb[0].mxu0
  %v508 = vpop.f32.mrb[0].mxu0
  %v509 = vadd.f32 0.0, %v508
  %v510 = vpop.f32.mrb[0].mxu0
  %511 = vdwg.mxu0
  %v528 = vunpack.c.l.b16 %v380
  %v529 = vunpack.c.l.b16 %v381
  %v530 = vunpack.c.l.b16 %v382
  %v531 = vunpack.c.l.b16 %v383
  %v532 = vunpack.c.l.b16 %v384
  %v533 = vunpack.c.l.b16 %v385
  %v534 = vunpack.c.l.b16 %v386
  %v535 = vunpack.c.l.b16 %v387
  %v536 = vunpack.c.l.b16 %v388
  %v537 = vunpack.c.l.b16 %v389
  %v538 = vunpack.c.l.b16 %v390
  %v539 = vunpack.c.l.b16 %v391
  %v540 = vunpack.c.l.b16 %v392
  %v541 = vunpack.c.l.b16 %v393
  %v542 = vunpack.c.l.b16 %v394
  %v543 = vunpack.c.l.b16 %v395
  %v544 = vpack.c.b16 %v529, %v528
  %v545 = vpack.c.b16 %v531, %v530
  %v546 = vpack.c.b16 %v533, %v532
  %v547 = vpack.c.b16 %v535, %v534
  %v548 = vpack.c.b16 %v537, %v536
  %v549 = vpack.c.b16 %v539, %v538
  %v550 = vpack.c.b16 %v541, %v540
  %v551 = vpack.c.b16 %v543, %v542
  %560 = vmatprep.subr.bf16.mxu0 0
  %561 = vmatpush1.bf16.msra.mxu0 %v544
  %562 = vmatprep.subr.bf16.mxu0 0
  %563 = vmatpush1.bf16.msra.mxu0 %v545
  %564 = vmatprep.subr.bf16.mxu0 0
  %565 = vmatpush1.bf16.msra.mxu0 %v546
  %566 = vmatprep.subr.bf16.mxu0 0
  %567 = vmatpush1.bf16.msra.mxu0 %v547
  %568 = vmatprep.subr.bf16.mxu0 0
  %569 = vmatpush1.bf16.msra.mxu0 %v548
  %570 = vmatprep.subr.bf16.mxu0 0
  %571 = vmatpush1.bf16.msra.mxu0 %v549
  %572 = vmatprep.subr.bf16.mxu0 0
  %573 = vmatpush1.bf16.msra.mxu0 %v550
  %574 = vmatprep.subr.bf16.mxu0 0
  %575 = vmatpush1.bf16.msra.mxu0 %v551
  %576 = vmatprep.subr.bf16.mxu0 0
  %577 = vmatpush1.bf16.msra.mxu0 0
  %578 = vmatprep.subr.bf16.mxu0 0
  %579 = vmatpush1.bf16.msra.mxu0 0
  %580 = vmatprep.subr.bf16.mxu0 0
  %581 = vmatpush1.bf16.msra.mxu0 0
  %582 = vmatprep.subr.bf16.mxu0 0
  %583 = vmatpush1.bf16.msra.mxu0 0
  %584 = vmatprep.subr.bf16.mxu0 0
  %585 = vmatpush1.bf16.msra.mxu0 0
  %586 = vmatprep.subr.bf16.mxu0 0
  %587 = vmatpush1.bf16.msra.mxu0 0
  %588 = vmatprep.subr.bf16.mxu0 0
  %589 = vmatpush1.bf16.msra.mxu0 0
  %590 = vmatprep.subr.bf16.mxu0 0
  %591 = vmatpush1.bf16.msra.mxu0 0
  %592 = vmatprep.mubr.bf16.mxu0 0
  %593 = vmatmul.mubr.bf16.gmra.mrb[0].mxu0 %v378
  %v594 = vpop.f32.mrb[0].mxu0
  %v595 = vadd.f32 %v498, %v594
  %v596 = vpop.f32.mrb[0].mxu0
  %v597 = vpop.f32.mrb[0].mxu0
  %v598 = vadd.f32 %v501, %v597
  %v599 = vpop.f32.mrb[0].mxu0
  %600 = vmatprep.mubr.bf16.mxu0 0
  %601 = vmatmul.mubr.bf16.gmra.mrb[0].mxu0 %v379
  %v602 = vpop.f32.mrb[0].mxu0
  %v603 = vadd.f32 %v506, %v602
  %v604 = vpop.f32.mrb[0].mxu0
  %v605 = vpop.f32.mrb[0].mxu0
  %v606 = vadd.f32 %v509, %v605
  %v607 = vpop.f32.mrb[0].mxu0
  %608 = vdwg.mxu0
  %v609 = vpack.c.bf16 %v375, %v374
  %v610 = vpack.c.bf16 %v377, %v376
  %s611 = scalar_lea.vmem %s1, 128
  %v612 = vld [vmem:[%s611] sm:$0xf]
  %v613 = vld [vmem:[%s611 + $0x4] sm:$0xf]
  %v614 = vld [vmem:[%s611 + $0x8] sm:$0xf]
  %v615 = vld [vmem:[%s611 + $0xc] sm:$0xf]
  %v616 = vld [vmem:[%s611 + $0x10] sm:$0xf]
  %v617 = vld [vmem:[%s611 + $0x14] sm:$0xf]
  %v618 = vld [vmem:[%s611 + $0x18] sm:$0xf]
  %v619 = vld [vmem:[%s611 + $0x1c] sm:$0xf]
  %v620 = vld [vmem:[%s611 + $0x20] sm:$0xf]
  %v621 = vld [vmem:[%s611 + $0x24] sm:$0xf]
  %v622 = vld [vmem:[%s611 + $0x28] sm:$0xf]
  %v623 = vld [vmem:[%s611 + $0x2c] sm:$0xf]
  %v624 = vld [vmem:[%s611 + $0x30] sm:$0xf]
  %v625 = vld [vmem:[%s611 + $0x34] sm:$0xf]
  %v626 = vld [vmem:[%s611 + $0x38] sm:$0xf]
  %v627 = vld [vmem:[%s611 + $0x3c] sm:$0xf]
  %v644 = vunpack.c.l.b16 %v612
  %v645 = vunpack.c.l.b16 %v613
  %v646 = vunpack.c.l.b16 %v614
  %v647 = vunpack.c.l.b16 %v615
  %v648 = vunpack.c.l.b16 %v616
  %v649 = vunpack.c.l.b16 %v617
  %v650 = vunpack.c.l.b16 %v618
  %v651 = vunpack.c.l.b16 %v619
  %v652 = vunpack.c.l.b16 %v620
  %v653 = vunpack.c.l.b16 %v621
  %v654 = vunpack.c.l.b16 %v622
  %v655 = vunpack.c.l.b16 %v623
  %v656 = vunpack.c.l.b16 %v624
  %v657 = vunpack.c.l.b16 %v625
  %v658 = vunpack.c.l.b16 %v626
  %v659 = vunpack.c.l.b16 %v627
  %v660 = vpack.c.b16 %v645, %v644
  %v661 = vpack.c.b16 %v647, %v646
  %v662 = vpack.c.b16 %v649, %v648
  %v663 = vpack.c.b16 %v651, %v650
  %v664 = vpack.c.b16 %v653, %v652
  %v665 = vpack.c.b16 %v655, %v654
  %v666 = vpack.c.b16 %v657, %v656
  %v667 = vpack.c.b16 %v659, %v658
  %676 = vmatprep.subr.bf16.mxu0 0
  %677 = vmatpush1.bf16.msra.mxu0 %v660
  %678 = vmatprep.subr.bf16.mxu0 0
  %679 = vmatpush1.bf16.msra.mxu0 %v661
  %680 = vmatprep.subr.bf16.mxu0 0
  %681 = vmatpush1.bf16.msra.mxu0 %v662
  %682 = vmatprep.subr.bf16.mxu0 0
  %683 = vmatpush1.bf16.msra.mxu0 %v663
  %684 = vmatprep.subr.bf16.mxu0 0
  %685 = vmatpush1.bf16.msra.mxu0 %v664
  %686 = vmatprep.subr.bf16.mxu0 0
  %687 = vmatpush1.bf16.msra.mxu0 %v665
  %688 = vmatprep.subr.bf16.mxu0 0
  %689 = vmatpush1.bf16.msra.mxu0 %v666
  %690 = vmatprep.subr.bf16.mxu0 0
  %691 = vmatpush1.bf16.msra.mxu0 %v667
  %692 = vmatprep.subr.bf16.mxu0 0
  %693 = vmatpush1.bf16.msra.mxu0 0
  %694 = vmatprep.subr.bf16.mxu0 0
  %695 = vmatpush1.bf16.msra.mxu0 0
  %696 = vmatprep.subr.bf16.mxu0 0
  %697 = vmatpush1.bf16.msra.mxu0 0
  %698 = vmatprep.subr.bf16.mxu0 0
  %699 = vmatpush1.bf16.msra.mxu0 0
  %700 = vmatprep.subr.bf16.mxu0 0
  %701 = vmatpush1.bf16.msra.mxu0 0
  %702 = vmatprep.subr.bf16.mxu0 0
  %703 = vmatpush1.bf16.msra.mxu0 0
  %704 = vmatprep.subr.bf16.mxu0 0
  %705 = vmatpush1.bf16.msra.mxu0 0
  %706 = vmatprep.subr.bf16.mxu0 0
  %707 = vmatpush1.bf16.msra.mxu0 0
  %708 = vmatprep.mubr.bf16.mxu0 0
  %709 = vmatmul.mubr.bf16.gmra.mrb[0].mxu0 %v609
  %v710 = vpop.f32.mrb[0].mxu0
  %v711 = vadd.f32 0.0, %v710
  %v712 = vpop.f32.mrb[0].mxu0
  %v713 = vpop.f32.mrb[0].mxu0
  %v714 = vadd.f32 0.0, %v713
  %v715 = vpop.f32.mrb[0].mxu0
  %716 = vmatprep.mubr.bf16.mxu0 0
  %717 = vmatmul.mubr.bf16.gmra.mrb[0].mxu0 %v610
  %v718 = vpop.f32.mrb[0].mxu0
  %v719 = vadd.f32 0.0, %v718
  %v720 = vpop.f32.mrb[0].mxu0
  %v721 = vpop.f32.mrb[0].mxu0
  %v722 = vadd.f32 0.0, %v721
  %v723 = vpop.f32.mrb[0].mxu0
  %724 = vdwg.mxu0
  %v725 = vadd.f32 %v595, %v711
  %v726 = vadd.f32 %v598, %v714
  %v727 = vadd.f32 %v603, %v719
  %v728 = vadd.f32 %v606, %v722
  %v729 = vadd.f32 %v725, %v726
  %v730 = vadd.f32 %v729, %v727
  %v731 = vadd.f32 %v730, %v728
  %v732 = vrot.slane %v731, 4
  %v733 = vadd.f32 %v731, %v732
  %v734 = vrot.slane %v733, 2
  %v735 = vadd.f32 %v733, %v734
  %v736 = vrot.slane %v735, 1
  %v737 = vadd.f32 %v735, %v736
  %v738 = vmul.f32 %v725, %v725
  %v739 = vmul.f32 %v726, %v726
  %v740 = vmul.f32 %v727, %v727
  %v741 = vmul.f32 %v728, %v728
  %v742 = vadd.f32 %v738, %v739
  %v743 = vadd.f32 %v742, %v740
  %v744 = vadd.f32 %v743, %v741
  %v745 = vrot.slane %v744, 4
  %v746 = vadd.f32 %v744, %v745
  %v747 = vrot.slane %v746, 2
  %v748 = vadd.f32 %v746, %v747
  %v749 = vrot.slane %v748, 1
  %v750 = vadd.f32 %v748, %v749
  %vm751 = vcmask 1040384
  %v752 = vsel %vm751, %v737, %v750
  %753 = vmatprep.subr.mxu0 0.0
  %754 = vmatpush1.msra.mxu0 %v332
  %755 = vmatprep.subr.mxu0 0.0
  %756 = vmatpush1.msra.mxu0 %v333
  %757 = vmatprep.subr.mxu0 0.0
  %758 = vmatpush1.msra.mxu0 %v334
  %759 = vmatprep.subr.mxu0 0.0
  %760 = vmatpush1.msra.mxu0 %v335
  %761 = vmatprep.subr.mxu0 0.0
  %762 = vmatpush1.msra.mxu0 %v336
  %763 = vmatprep.subr.mxu0 0.0
  %764 = vmatpush1.msra.mxu0 %v337
  %765 = vmatprep.subr.mxu0 0.0
  %766 = vmatpush1.msra.mxu0 %v338
  %767 = vmatprep.subr.mxu0 0.0
  %768 = vmatpush1.msra.mxu0 %v339
  %769 = vmatprep.subr.mxu0 0.0
  %770 = vmatpush1.msra.mxu0 %v340
  %771 = vmatprep.subr.mxu0 0.0
  %772 = vmatpush1.msra.mxu0 %v341
  %773 = vmatprep.subr.mxu0 0.0
  %774 = vmatpush1.msra.mxu0 %v342
  %775 = vmatprep.subr.mxu0 0.0
  %776 = vmatpush1.msra.mxu0 %v343
  %777 = vmatprep.subr.mxu0 0.0
  %778 = vmatpush1.msra.mxu0 %v344
  %779 = vmatprep.subr.mxu0 0.0
  %780 = vmatpush1.msra.mxu0 %v345
  %781 = vmatprep.subr.mxu0 0.0
  %782 = vmatpush1.msra.mxu0 %v346
  %783 = vmatprep.subr.mxu0 0.0
  %784 = vmatpush1.msra.mxu0 %v347
  %785 = vmatprep.subr.mxu0 0.0
  %786 = vmatpush1.msra.mxu0 0.0
  %787 = vmatprep.subr.mxu0 0.0
  %788 = vmatpush1.msra.mxu0 0.0
  %789 = vmatprep.subr.mxu0 0.0
  %790 = vmatpush1.msra.mxu0 0.0
  %791 = vmatprep.subr.mxu0 0.0
  %792 = vmatpush1.msra.mxu0 0.0
  %793 = vmatprep.subr.mxu0 0.0
  %794 = vmatpush1.msra.mxu0 0.0
  %795 = vmatprep.subr.mxu0 0.0
  %796 = vmatpush1.msra.mxu0 0.0
  %797 = vmatprep.subr.mxu0 0.0
  %798 = vmatpush1.msra.mxu0 0.0
  %799 = vmatprep.subr.mxu0 0.0
  %800 = vmatpush1.msra.mxu0 0.0
  %801 = vmatprep.subr.mxu0 0.0
  %802 = vmatpush1.msra.mxu0 0.0
  %803 = vmatprep.subr.mxu0 0.0
  %804 = vmatpush1.msra.mxu0 0.0
  %805 = vmatprep.subr.mxu0 0.0
  %806 = vmatpush1.msra.mxu0 0.0
  %807 = vmatprep.subr.mxu0 0.0
  %808 = vmatpush1.msra.mxu0 0.0
  %809 = vmatprep.subr.mxu0 0.0
  %810 = vmatpush1.msra.mxu0 0.0
  %811 = vmatprep.subr.mxu0 0.0
  %812 = vmatpush1.msra.mxu0 0.0
  %813 = vmatprep.subr.mxu0 0.0
  %814 = vmatpush1.msra.mxu0 0.0
  %815 = vmatprep.subr.mxu0 0.0
  %816 = vmatpush1.msra.mxu0 0.0
  %817 = vmatprep.mubr.f32.mxu0 0.0
  %818 = vmatmul.mubr.f32.gmra.mrb[0].mxu0 %v752
  %v819 = vpop.f32.mrb[0].mxu0
  %v820 = vadd.f32 0.0, %v819
  %v821 = vpop.f32.mrb[0].mxu0
  %822 = vdwg.mxu0
  %v823 = vmul.f32 %v820, 0.001953125
  %v824 = vmul.f32 %v823, %v823
  %v826 = vrot.slane %v824, 7
  %v828 = vsub.f32 %v823, %v826
  %v829 = vld [vmem:[%s2] sm:$0x1]
  %v830 = vadd.f32 %v828, 1e-05
  %v831 = vrsqrt.pop %v830
  %v833 = vrot.slane %v831, 1
  %v835 = vmul.f32 %v829, %v833
  %v836 = vld [vmem:[%s2 + $0x1] sm:$0x1]
  %v837 = vmul.f32 %v823, %v835
  %v838 = vsub.f32 %v836, %v837
  %v839 = vlaneseq
  %v840 = vshrl.u32 %v839, 7
  %v841 = vsub.s32 0, %v840
  %v842 = vrot.slane %v835, %v841
  %v843 = vmul.f32 %v725, %v842
  %v844 = vmul.f32 %v726, %v842
  %v845 = vmul.f32 %v727, %v842
  %v846 = vmul.f32 %v728, %v842
  %v847 = vlaneseq
  %v848 = vshrl.u32 %v847, 7
  %v849 = vsub.s32 0, %v848
  %v850 = vrot.slane %v838, %v849
  %v851 = vadd.f32 %v843, %v850
  %v852 = vadd.f32 %v844, %v850
  %v853 = vadd.f32 %v845, %v850
  %v854 = vadd.f32 %v846, %v850
  %v855 = vmax.f32 %v851, 0.0
  %v856 = vmax.f32 %v852, 0.0
  %v857 = vmax.f32 %v853, 0.0
  %v858 = vmax.f32 %v854, 0.0
  %v859 = vrot.slane %v855, 7
  %v860 = vrot.slane %v856, 7
  %v861 = vrot.slane %v857, 7
  %v862 = vrot.slane %v858, 7
  %v863 = vsel %vm356, %v861, %v862
  %v864 = vsel %vm356, %v860, %v861
  %v865 = vsel %vm356, %v859, %v860
  %v866 = vsel %vm356, %v862, %v859
  %v867 = vsel %vm74, %v866, 0.0
  %v868 = vsel %vm75, %v865, 0.0
  %v869 = vsel %vm76, %v864, 0.0
  %v870 = vsel %vm77, %v863, 0.0
  %v871 = vrot.slane %v855, 1
  %v872 = vrot.slane %v856, 1
  %v873 = vrot.slane %v857, 1
  %v874 = vrot.slane %v858, 1
  %v875 = vsel %vm369, %v873, %v874
  %v876 = vsel %vm369, %v872, %v873
  %v877 = vsel %vm369, %v871, %v872
  %v878 = vsel %vm369, %v874, %v871
  %v879 = vsel %vm78, %v877, 0.0
  %v880 = vsel %vm79, %v876, 0.0
  %v881 = vsel %vm80, %v875, 0.0
  %v882 = vsel %vm81, %v878, 0.0
  %v883 = vpack.c.bf16 %v868, %v867
  %v884 = vpack.c.bf16 %v870, %v869
  %v885 = vld [vmem:[%s3] sm:$0xf]
  %v886 = vld [vmem:[%s3 + $0x4] sm:$0xf]
  %v887 = vld [vmem:[%s3 + $0x8] sm:$0xf]
  %v888 = vld [vmem:[%s3 + $0xc] sm:$0xf]
  %v889 = vld [vmem:[%s3 + $0x10] sm:$0xf]
  %v890 = vld [vmem:[%s3 + $0x14] sm:$0xf]
  %v891 = vld [vmem:[%s3 + $0x18] sm:$0xf]
  %v892 = vld [vmem:[%s3 + $0x1c] sm:$0xf]
  %v893 = vld [vmem:[%s3 + $0x20] sm:$0xf]
  %v894 = vld [vmem:[%s3 + $0x24] sm:$0xf]
  %v895 = vld [vmem:[%s3 + $0x28] sm:$0xf]
  %v896 = vld [vmem:[%s3 + $0x2c] sm:$0xf]
  %v897 = vld [vmem:[%s3 + $0x30] sm:$0xf]
  %v898 = vld [vmem:[%s3 + $0x34] sm:$0xf]
  %v899 = vld [vmem:[%s3 + $0x38] sm:$0xf]
  %v900 = vld [vmem:[%s3 + $0x3c] sm:$0xf]
  %v901 = vpack.c.bf16 %v856, %v855
  %v902 = vpack.c.bf16 %v858, %v857
  %s903 = scalar_lea.vmem %s3, 64
  %v904 = vld [vmem:[%s903] sm:$0xf]
  %v905 = vld [vmem:[%s903 + $0x4] sm:$0xf]
  %v906 = vld [vmem:[%s903 + $0x8] sm:$0xf]
  %v907 = vld [vmem:[%s903 + $0xc] sm:$0xf]
  %v908 = vld [vmem:[%s903 + $0x10] sm:$0xf]
  %v909 = vld [vmem:[%s903 + $0x14] sm:$0xf]
  %v910 = vld [vmem:[%s903 + $0x18] sm:$0xf]
  %v911 = vld [vmem:[%s903 + $0x1c] sm:$0xf]
  %v912 = vld [vmem:[%s903 + $0x20] sm:$0xf]
  %v913 = vld [vmem:[%s903 + $0x24] sm:$0xf]
  %v914 = vld [vmem:[%s903 + $0x28] sm:$0xf]
  %v915 = vld [vmem:[%s903 + $0x2c] sm:$0xf]
  %v916 = vld [vmem:[%s903 + $0x30] sm:$0xf]
  %v917 = vld [vmem:[%s903 + $0x34] sm:$0xf]
  %v918 = vld [vmem:[%s903 + $0x38] sm:$0xf]
  %v919 = vld [vmem:[%s903 + $0x3c] sm:$0xf]
  %v936 = vunpack.c.l.b16 %v904
  %v937 = vunpack.c.l.b16 %v905
  %v938 = vunpack.c.l.b16 %v906
  %v939 = vunpack.c.l.b16 %v907
  %v940 = vunpack.c.l.b16 %v908
  %v941 = vunpack.c.l.b16 %v909
  %v942 = vunpack.c.l.b16 %v910
  %v943 = vunpack.c.l.b16 %v911
  %v944 = vunpack.c.l.b16 %v912
  %v945 = vunpack.c.l.b16 %v913
  %v946 = vunpack.c.l.b16 %v914
  %v947 = vunpack.c.l.b16 %v915
  %v948 = vunpack.c.l.b16 %v916
  %v949 = vunpack.c.l.b16 %v917
  %v950 = vunpack.c.l.b16 %v918
  %v951 = vunpack.c.l.b16 %v919
  %v952 = vpack.c.b16 %v937, %v936
  %v953 = vpack.c.b16 %v939, %v938
  %v954 = vpack.c.b16 %v941, %v940
  %v955 = vpack.c.b16 %v943, %v942
  %v956 = vpack.c.b16 %v945, %v944
  %v957 = vpack.c.b16 %v947, %v946
  %v958 = vpack.c.b16 %v949, %v948
  %v959 = vpack.c.b16 %v951, %v950
  %968 = vmatprep.subr.bf16.mxu0 0
  %969 = vmatpush1.bf16.msra.mxu0 %v952
  %970 = vmatprep.subr.bf16.mxu0 0
  %971 = vmatpush1.bf16.msra.mxu0 %v953
  %972 = vmatprep.subr.bf16.mxu0 0
  %973 = vmatpush1.bf16.msra.mxu0 %v954
  %974 = vmatprep.subr.bf16.mxu0 0
  %975 = vmatpush1.bf16.msra.mxu0 %v955
  %976 = vmatprep.subr.bf16.mxu0 0
  %977 = vmatpush1.bf16.msra.mxu0 %v956
  %978 = vmatprep.subr.bf16.mxu0 0
  %979 = vmatpush1.bf16.msra.mxu0 %v957
  %980 = vmatprep.subr.bf16.mxu0 0
  %981 = vmatpush1.bf16.msra.mxu0 %v958
  %982 = vmatprep.subr.bf16.mxu0 0
  %983 = vmatpush1.bf16.msra.mxu0 %v959
  %984 = vmatprep.subr.bf16.mxu0 0
  %985 = vmatpush1.bf16.msra.mxu0 0
  %986 = vmatprep.subr.bf16.mxu0 0
  %987 = vmatpush1.bf16.msra.mxu0 0
  %988 = vmatprep.subr.bf16.mxu0 0
  %989 = vmatpush1.bf16.msra.mxu0 0
  %990 = vmatprep.subr.bf16.mxu0 0
  %991 = vmatpush1.bf16.msra.mxu0 0
  %992 = vmatprep.subr.bf16.mxu0 0
  %993 = vmatpush1.bf16.msra.mxu0 0
  %994 = vmatprep.subr.bf16.mxu0 0
  %995 = vmatpush1.bf16.msra.mxu0 0
  %996 = vmatprep.subr.bf16.mxu0 0
  %997 = vmatpush1.bf16.msra.mxu0 0
  %998 = vmatprep.subr.bf16.mxu0 0
  %999 = vmatpush1.bf16.msra.mxu0 0
  %1000 = vmatprep.mubr.bf16.mxu0 0
  %1001 = vmatmul.mubr.bf16.gmra.mrb[0].mxu0 %v901
  %v1002 = vpop.f32.mrb[0].mxu0
  %v1003 = vadd.f32 0.0, %v1002
  %v1004 = vpop.f32.mrb[0].mxu0
  %v1005 = vpop.f32.mrb[0].mxu0
  %v1006 = vadd.f32 0.0, %v1005
  %v1007 = vpop.f32.mrb[0].mxu0
  %1008 = vmatprep.mubr.bf16.mxu0 0
  %1009 = vmatmul.mubr.bf16.gmra.mrb[0].mxu0 %v902
  %v1010 = vpop.f32.mrb[0].mxu0
  %v1011 = vadd.f32 0.0, %v1010
  %v1012 = vpop.f32.mrb[0].mxu0
  %v1013 = vpop.f32.mrb[0].mxu0
  %v1014 = vadd.f32 0.0, %v1013
  %v1015 = vpop.f32.mrb[0].mxu0
  %1016 = vdwg.mxu0
  %v1033 = vunpack.c.l.b16 %v885
  %v1034 = vunpack.c.l.b16 %v886
  %v1035 = vunpack.c.l.b16 %v887
  %v1036 = vunpack.c.l.b16 %v888
  %v1037 = vunpack.c.l.b16 %v889
  %v1038 = vunpack.c.l.b16 %v890
  %v1039 = vunpack.c.l.b16 %v891
  %v1040 = vunpack.c.l.b16 %v892
  %v1041 = vunpack.c.l.b16 %v893
  %v1042 = vunpack.c.l.b16 %v894
  %v1043 = vunpack.c.l.b16 %v895
  %v1044 = vunpack.c.l.b16 %v896
  %v1045 = vunpack.c.l.b16 %v897
  %v1046 = vunpack.c.l.b16 %v898
  %v1047 = vunpack.c.l.b16 %v899
  %v1048 = vunpack.c.l.b16 %v900
  %v1049 = vpack.c.b16 %v1034, %v1033
  %v1050 = vpack.c.b16 %v1036, %v1035
  %v1051 = vpack.c.b16 %v1038, %v1037
  %v1052 = vpack.c.b16 %v1040, %v1039
  %v1053 = vpack.c.b16 %v1042, %v1041
  %v1054 = vpack.c.b16 %v1044, %v1043
  %v1055 = vpack.c.b16 %v1046, %v1045
  %v1056 = vpack.c.b16 %v1048, %v1047
  %1065 = vmatprep.subr.bf16.mxu0 0
  %1066 = vmatpush1.bf16.msra.mxu0 %v1049
  %1067 = vmatprep.subr.bf16.mxu0 0
  %1068 = vmatpush1.bf16.msra.mxu0 %v1050
  %1069 = vmatprep.subr.bf16.mxu0 0
  %1070 = vmatpush1.bf16.msra.mxu0 %v1051
  %1071 = vmatprep.subr.bf16.mxu0 0
  %1072 = vmatpush1.bf16.msra.mxu0 %v1052
  %1073 = vmatprep.subr.bf16.mxu0 0
  %1074 = vmatpush1.bf16.msra.mxu0 %v1053
  %1075 = vmatprep.subr.bf16.mxu0 0
  %1076 = vmatpush1.bf16.msra.mxu0 %v1054
  %1077 = vmatprep.subr.bf16.mxu0 0
  %1078 = vmatpush1.bf16.msra.mxu0 %v1055
  %1079 = vmatprep.subr.bf16.mxu0 0
  %1080 = vmatpush1.bf16.msra.mxu0 %v1056
  %1081 = vmatprep.subr.bf16.mxu0 0
  %1082 = vmatpush1.bf16.msra.mxu0 0
  %1083 = vmatprep.subr.bf16.mxu0 0
  %1084 = vmatpush1.bf16.msra.mxu0 0
  %1085 = vmatprep.subr.bf16.mxu0 0
  %1086 = vmatpush1.bf16.msra.mxu0 0
  %1087 = vmatprep.subr.bf16.mxu0 0
  %1088 = vmatpush1.bf16.msra.mxu0 0
  %1089 = vmatprep.subr.bf16.mxu0 0
  %1090 = vmatpush1.bf16.msra.mxu0 0
  %1091 = vmatprep.subr.bf16.mxu0 0
  %1092 = vmatpush1.bf16.msra.mxu0 0
  %1093 = vmatprep.subr.bf16.mxu0 0
  %1094 = vmatpush1.bf16.msra.mxu0 0
  %1095 = vmatprep.subr.bf16.mxu0 0
  %1096 = vmatpush1.bf16.msra.mxu0 0
  %1097 = vmatprep.mubr.bf16.mxu0 0
  %1098 = vmatmul.mubr.bf16.gmra.mrb[0].mxu0 %v883
  %v1099 = vpop.f32.mrb[0].mxu0
  %v1100 = vadd.f32 %v1003, %v1099
  %v1101 = vpop.f32.mrb[0].mxu0
  %v1102 = vpop.f32.mrb[0].mxu0
  %v1103 = vadd.f32 %v1006, %v1102
  %v1104 = vpop.f32.mrb[0].mxu0
  %1105 = vmatprep.mubr.bf16.mxu0 0
  %1106 = vmatmul.mubr.bf16.gmra.mrb[0].mxu0 %v884
  %v1107 = vpop.f32.mrb[0].mxu0
  %v1108 = vadd.f32 %v1011, %v1107
  %v1109 = vpop.f32.mrb[0].mxu0
  %v1110 = vpop.f32.mrb[0].mxu0
  %v1111 = vadd.f32 %v1014, %v1110
  %v1112 = vpop.f32.mrb[0].mxu0
  %1113 = vdwg.mxu0
  %v1114 = vpack.c.bf16 %v880, %v879
  %v1115 = vpack.c.bf16 %v882, %v881
  %s1116 = scalar_lea.vmem %s3, 128
  %v1117 = vld [vmem:[%s1116] sm:$0xf]
  %v1118 = vld [vmem:[%s1116 + $0x4] sm:$0xf]
  %v1119 = vld [vmem:[%s1116 + $0x8] sm:$0xf]
  %v1120 = vld [vmem:[%s1116 + $0xc] sm:$0xf]
  %v1121 = vld [vmem:[%s1116 + $0x10] sm:$0xf]
  %v1122 = vld [vmem:[%s1116 + $0x14] sm:$0xf]
  %v1123 = vld [vmem:[%s1116 + $0x18] sm:$0xf]
  %v1124 = vld [vmem:[%s1116 + $0x1c] sm:$0xf]
  %v1125 = vld [vmem:[%s1116 + $0x20] sm:$0xf]
  %v1126 = vld [vmem:[%s1116 + $0x24] sm:$0xf]
  %v1127 = vld [vmem:[%s1116 + $0x28] sm:$0xf]
  %v1128 = vld [vmem:[%s1116 + $0x2c] sm:$0xf]
  %v1129 = vld [vmem:[%s1116 + $0x30] sm:$0xf]
  %v1130 = vld [vmem:[%s1116 + $0x34] sm:$0xf]
  %v1131 = vld [vmem:[%s1116 + $0x38] sm:$0xf]
  %v1132 = vld [vmem:[%s1116 + $0x3c] sm:$0xf]
  %v1149 = vunpack.c.l.b16 %v1117
  %v1150 = vunpack.c.l.b16 %v1118
  %v1151 = vunpack.c.l.b16 %v1119
  %v1152 = vunpack.c.l.b16 %v1120
  %v1153 = vunpack.c.l.b16 %v1121
  %v1154 = vunpack.c.l.b16 %v1122
  %v1155 = vunpack.c.l.b16 %v1123
  %v1156 = vunpack.c.l.b16 %v1124
  %v1157 = vunpack.c.l.b16 %v1125
  %v1158 = vunpack.c.l.b16 %v1126
  %v1159 = vunpack.c.l.b16 %v1127
  %v1160 = vunpack.c.l.b16 %v1128
  %v1161 = vunpack.c.l.b16 %v1129
  %v1162 = vunpack.c.l.b16 %v1130
  %v1163 = vunpack.c.l.b16 %v1131
  %v1164 = vunpack.c.l.b16 %v1132
  %v1165 = vpack.c.b16 %v1150, %v1149
  %v1166 = vpack.c.b16 %v1152, %v1151
  %v1167 = vpack.c.b16 %v1154, %v1153
  %v1168 = vpack.c.b16 %v1156, %v1155
  %v1169 = vpack.c.b16 %v1158, %v1157
  %v1170 = vpack.c.b16 %v1160, %v1159
  %v1171 = vpack.c.b16 %v1162, %v1161
  %v1172 = vpack.c.b16 %v1164, %v1163
  %1181 = vmatprep.subr.bf16.mxu0 0
  %1182 = vmatpush1.bf16.msra.mxu0 %v1165
  %1183 = vmatprep.subr.bf16.mxu0 0
  %1184 = vmatpush1.bf16.msra.mxu0 %v1166
  %1185 = vmatprep.subr.bf16.mxu0 0
  %1186 = vmatpush1.bf16.msra.mxu0 %v1167
  %1187 = vmatprep.subr.bf16.mxu0 0
  %1188 = vmatpush1.bf16.msra.mxu0 %v1168
  %1189 = vmatprep.subr.bf16.mxu0 0
  %1190 = vmatpush1.bf16.msra.mxu0 %v1169
  %1191 = vmatprep.subr.bf16.mxu0 0
  %1192 = vmatpush1.bf16.msra.mxu0 %v1170
  %1193 = vmatprep.subr.bf16.mxu0 0
  %1194 = vmatpush1.bf16.msra.mxu0 %v1171
  %1195 = vmatprep.subr.bf16.mxu0 0
  %1196 = vmatpush1.bf16.msra.mxu0 %v1172
  %1197 = vmatprep.subr.bf16.mxu0 0
  %1198 = vmatpush1.bf16.msra.mxu0 0
  %1199 = vmatprep.subr.bf16.mxu0 0
  %1200 = vmatpush1.bf16.msra.mxu0 0
  %1201 = vmatprep.subr.bf16.mxu0 0
  %1202 = vmatpush1.bf16.msra.mxu0 0
  %1203 = vmatprep.subr.bf16.mxu0 0
  %1204 = vmatpush1.bf16.msra.mxu0 0
  %1205 = vmatprep.subr.bf16.mxu0 0
  %1206 = vmatpush1.bf16.msra.mxu0 0
  %1207 = vmatprep.subr.bf16.mxu0 0
  %1208 = vmatpush1.bf16.msra.mxu0 0
  %1209 = vmatprep.subr.bf16.mxu0 0
  %1210 = vmatpush1.bf16.msra.mxu0 0
  %1211 = vmatprep.subr.bf16.mxu0 0
  %1212 = vmatpush1.bf16.msra.mxu0 0
  %1213 = vmatprep.mubr.bf16.mxu0 0
  %1214 = vmatmul.mubr.bf16.gmra.mrb[0].mxu0 %v1114
  %v1215 = vpop.f32.mrb[0].mxu0
  %v1216 = vadd.f32 0.0, %v1215
  %v1217 = vpop.f32.mrb[0].mxu0
  %v1218 = vpop.f32.mrb[0].mxu0
  %v1219 = vadd.f32 0.0, %v1218
  %v1220 = vpop.f32.mrb[0].mxu0
  %1221 = vmatprep.mubr.bf16.mxu0 0
  %1222 = vmatmul.mubr.bf16.gmra.mrb[0].mxu0 %v1115
  %v1223 = vpop.f32.mrb[0].mxu0
  %v1224 = vadd.f32 0.0, %v1223
  %v1225 = vpop.f32.mrb[0].mxu0
  %v1226 = vpop.f32.mrb[0].mxu0
  %v1227 = vadd.f32 0.0, %v1226
  %v1228 = vpop.f32.mrb[0].mxu0
  %1229 = vdwg.mxu0
  %v1230 = vadd.f32 %v1100, %v1216
  %v1231 = vadd.f32 %v1103, %v1219
  %v1232 = vadd.f32 %v1108, %v1224
  %v1233 = vadd.f32 %v1111, %v1227
  %v1234 = vadd.f32 %v1230, %v1231
  %v1235 = vadd.f32 %v1234, %v1232
  %v1236 = vadd.f32 %v1235, %v1233
  %v1237 = vrot.slane %v1236, 4
  %v1238 = vadd.f32 %v1236, %v1237
  %v1239 = vrot.slane %v1238, 2
  %v1240 = vadd.f32 %v1238, %v1239
  %v1241 = vrot.slane %v1240, 1
  %v1242 = vadd.f32 %v1240, %v1241
  %v1243 = vmul.f32 %v1230, %v1230
  %v1244 = vmul.f32 %v1231, %v1231
  %v1245 = vmul.f32 %v1232, %v1232
  %v1246 = vmul.f32 %v1233, %v1233
  %v1247 = vadd.f32 %v1243, %v1244
  %v1248 = vadd.f32 %v1247, %v1245
  %v1249 = vadd.f32 %v1248, %v1246
  %v1250 = vrot.slane %v1249, 4
  %v1251 = vadd.f32 %v1249, %v1250
  %v1252 = vrot.slane %v1251, 2
  %v1253 = vadd.f32 %v1251, %v1252
  %v1254 = vrot.slane %v1253, 1
  %v1255 = vadd.f32 %v1253, %v1254
  %v1256 = vsel %vm751, %v1242, %v1255
  %1257 = vmatprep.subr.mxu0 0.0
  %1258 = vmatpush1.msra.mxu0 %v332
  %1259 = vmatprep.subr.mxu0 0.0
  %1260 = vmatpush1.msra.mxu0 %v333
  %1261 = vmatprep.subr.mxu0 0.0
  %1262 = vmatpush1.msra.mxu0 %v334
  %1263 = vmatprep.subr.mxu0 0.0
  %1264 = vmatpush1.msra.mxu0 %v335
  %1265 = vmatprep.subr.mxu0 0.0
  %1266 = vmatpush1.msra.mxu0 %v336
  %1267 = vmatprep.subr.mxu0 0.0
  %1268 = vmatpush1.msra.mxu0 %v337
  %1269 = vmatprep.subr.mxu0 0.0
  %1270 = vmatpush1.msra.mxu0 %v338
  %1271 = vmatprep.subr.mxu0 0.0
  %1272 = vmatpush1.msra.mxu0 %v339
  %1273 = vmatprep.subr.mxu0 0.0
  %1274 = vmatpush1.msra.mxu0 %v340
  %1275 = vmatprep.subr.mxu0 0.0
  %1276 = vmatpush1.msra.mxu0 %v341
  %1277 = vmatprep.subr.mxu0 0.0
  %1278 = vmatpush1.msra.mxu0 %v342
  %1279 = vmatprep.subr.mxu0 0.0
  %1280 = vmatpush1.msra.mxu0 %v343
  %1281 = vmatprep.subr.mxu0 0.0
  %1282 = vmatpush1.msra.mxu0 %v344
  %1283 = vmatprep.subr.mxu0 0.0
  %1284 = vmatpush1.msra.mxu0 %v345
  %1285 = vmatprep.subr.mxu0 0.0
  %1286 = vmatpush1.msra.mxu0 %v346
  %1287 = vmatprep.subr.mxu0 0.0
  %1288 = vmatpush1.msra.mxu0 %v347
  %1289 = vmatprep.subr.mxu0 0.0
  %1290 = vmatpush1.msra.mxu0 0.0
  %1291 = vmatprep.subr.mxu0 0.0
  %1292 = vmatpush1.msra.mxu0 0.0
  %1293 = vmatprep.subr.mxu0 0.0
  %1294 = vmatpush1.msra.mxu0 0.0
  %1295 = vmatprep.subr.mxu0 0.0
  %1296 = vmatpush1.msra.mxu0 0.0
  %1297 = vmatprep.subr.mxu0 0.0
  %1298 = vmatpush1.msra.mxu0 0.0
  %1299 = vmatprep.subr.mxu0 0.0
  %1300 = vmatpush1.msra.mxu0 0.0
  %1301 = vmatprep.subr.mxu0 0.0
  %1302 = vmatpush1.msra.mxu0 0.0
  %1303 = vmatprep.subr.mxu0 0.0
  %1304 = vmatpush1.msra.mxu0 0.0
  %1305 = vmatprep.subr.mxu0 0.0
  %1306 = vmatpush1.msra.mxu0 0.0
  %1307 = vmatprep.subr.mxu0 0.0
  %1308 = vmatpush1.msra.mxu0 0.0
  %1309 = vmatprep.subr.mxu0 0.0
  %1310 = vmatpush1.msra.mxu0 0.0
  %1311 = vmatprep.subr.mxu0 0.0
  %1312 = vmatpush1.msra.mxu0 0.0
  %1313 = vmatprep.subr.mxu0 0.0
  %1314 = vmatpush1.msra.mxu0 0.0
  %1315 = vmatprep.subr.mxu0 0.0
  %1316 = vmatpush1.msra.mxu0 0.0
  %1317 = vmatprep.subr.mxu0 0.0
  %1318 = vmatpush1.msra.mxu0 0.0
  %1319 = vmatprep.subr.mxu0 0.0
  %1320 = vmatpush1.msra.mxu0 0.0
  %1321 = vmatprep.mubr.f32.mxu0 0.0
  %1322 = vmatmul.mubr.f32.gmra.mrb[0].mxu0 %v1256
  %v1323 = vpop.f32.mrb[0].mxu0
  %v1324 = vadd.f32 0.0, %v1323
  %v1325 = vpop.f32.mrb[0].mxu0
  %1326 = vdwg.mxu0
  %v1327 = vmul.f32 %v1324, 0.001953125
  %v1328 = vmul.f32 %v1327, %v1327
  %v1330 = vrot.slane %v1328, 7
  %v1332 = vsub.f32 %v1327, %v1330
  %v1333 = vld [vmem:[%s4] sm:$0x1]
  %v1334 = vadd.f32 %v1332, 1e-05
  %v1335 = vrsqrt.pop %v1334
  %v1337 = vrot.slane %v1335, 1
  %v1339 = vmul.f32 %v1333, %v1337
  %v1340 = vld [vmem:[%s4 + $0x1] sm:$0x1]
  %v1341 = vmul.f32 %v1327, %v1339
  %v1342 = vsub.f32 %v1340, %v1341
  %v1343 = vlaneseq
  %v1344 = vshrl.u32 %v1343, 7
  %v1345 = vsub.s32 0, %v1344
  %v1346 = vrot.slane %v1339, %v1345
  %v1347 = vmul.f32 %v1230, %v1346
  %v1348 = vmul.f32 %v1231, %v1346
  %v1349 = vmul.f32 %v1232, %v1346
  %v1350 = vmul.f32 %v1233, %v1346
  %v1351 = vlaneseq
  %v1352 = vshrl.u32 %v1351, 7
  %v1353 = vsub.s32 0, %v1352
  %v1354 = vrot.slane %v1342, %v1353
  %v1355 = vadd.f32 %v1347, %v1354
  %v1356 = vadd.f32 %v1348, %v1354
  %v1357 = vadd.f32 %v1349, %v1354
  %v1358 = vadd.f32 %v1350, %v1354
  %v1359 = vadd.f32 %v1355, %v348
  %v1360 = vadd.f32 %v1356, %v349
  %v1361 = vadd.f32 %v1357, %v350
  %v1362 = vadd.f32 %v1358, %v351
  %v1363 = vmax.f32 %v1359, 0.0
  %v1364 = vmax.f32 %v1360, 0.0
  %v1365 = vmax.f32 %v1361, 0.0
  %v1366 = vmax.f32 %v1362, 0.0
  %1367 = vst [vmem:[%s5] sm:$0xff] %v1363
  %1368 = vst [vmem:[%s5 + $0x8] sm:$0xff] %v1364
  %1369 = vst [vmem:[%s5 + $0x10] sm:$0xff] %v1365
  %1370 = vst [vmem:[%s5 + $0x18] sm:$0xff] %v1366
  // Predicated region
  $region22: #{residual_block_forward.1} parent=0 // pred_check
    _
  $region23: #{residual_block_forward.1} parent=0 // pred_check_branch
    %1372 = sbr.rel (0) target = $region25
  $region24: #{residual_block_forward.1} parent=0 // pred_region
    _
  $region25: #{residual_block_forward.1} parent=0 // pred_fallthru
    _
  // Predicated region
  $region26: #{residual_block_forward.1} parent=0 // pred_check
    _
  $region27: #{residual_block_forward.1} parent=0 // pred_check_branch
    %1374 = sbr.rel (0) target = $region29
  $region28: #{residual_block_forward.1} parent=0 // pred_region
    _
  $region29: #{residual_block_forward.1} parent=0 // pred_fallthru
    _

</llo_original>
